<compile_context>
chip_gen: v7x
topology: tpu7x:2x2x1
jax: 0.10.0
libtpu: 0.0.40
codegen_flags: <defaults>
</compile_context>

<pallas_src>
import functools

import jax
import jax.numpy as jnp
from jax import lax
from jax.experimental import pallas as pl
from jax.experimental.pallas import tpu as pltpu

LANE = 128      # TPU lane width: channel dims are padded to this
SUBLANE = 8     # sublane width: padded image width is rounded to a multiple


def _round_up(x, m):
    return (x + m - 1) // m * m


# ------------------------------ fused kernel --------------------------------

def _bottleneck_kernel(*refs, H, W, Wp, TH, stride, use_res, do_expand):
    """One grid step = (batch element n, output rows [r*TH, (r+1)*TH))."""
    if do_expand:
        x_ref, w1_ref, b1_ref, wdw_ref, b2_ref, w2_ref, b3_ref, o_ref = refs
    else:
        x_ref, wdw_ref, b2_ref, w2_ref, b3_ref, o_ref = refs

    r = pl.program_id(1)
    s = stride
    HH = (TH - 1) * s + 3           # input rows needed (incl. 3x3 halo)
    Wo = (W - 1) // s + 1
    row_span = (TH - 1) * s + 1     # row extent touched by one tap
    col_span = (Wo - 1) * s + 1     # col extent touched by one tap

    # First row (in the halo-padded image) of the input slab for this tile.
    row0 = pl.multiple_of(r * (TH * s), TH * s)
    x_slab = x_ref[0, pl.ds(row0, HH), :, :]            # (HH, Wp, Cin_p), f32

    # ---- stage 1: 1x1 expand (BN scale folded into w1) + bias + ReLU6 ------
    if do_expand:
        cin_p = x_slab.shape[-1]
        ch_p = w1_ref.shape[-1]
        # bf16 operands for the MXU (weights already bf16 from the wrapper).
        xs = x_slab.reshape(HH * Wp, cin_p).astype(jnp.bfloat16)   # Wp%8==0 -> free
        h = jnp.dot(xs, w1_ref[...], preferred_element_type=jnp.float32)
        h = jnp.clip(h + b1_ref[...], 0.0, 6.0)
        h = h.reshape(HH, Wp, ch_p)
        # The conv halo / alignment padding must stay exactly zero, but the
        # folded bias (+ReLU6) made it non-zero -> mask it back to zero.
        prow = row0 + lax.broadcasted_iota(jnp.int32, (HH, Wp, 1), 0)
        pcol = lax.broadcasted_iota(jnp.int32, (HH, Wp, 1), 1)
        valid = (prow >= 1) & (prow <= H) & (pcol >= 1) & (pcol <= W)
        h = jnp.where(valid, h, 0.0)
    else:
        h = x_slab                                       # hidden == input chans (f32)

    ch_p = h.shape[-1]

    # ---- stage 2: 3x3 depthwise (BN scale folded) + bias + ReLU6 -----------
    # Stride is folded into the tap slices (accumulate at output resolution);
    # column shifts use pltpu.roll (XLU) so every slice starts sublane-aligned.
    # Kept f32 for cross-generation safety (v5e VPU has no bf16 path); on
    # v6e/v7x a bf16 h/acc would double VALU throughput here.
    wdw = wdw_ref[...]                                   # (9, Ch_p), f32
    acc = jnp.zeros((TH, Wo, ch_p), jnp.float32)
    for kx in range(3):
        h_kx = h if kx == 0 else pltpu.roll(h, shift=Wp - kx, axis=1)
        for ky in range(3):
            tap = h_kx[ky:ky + row_span:s, 0:col_span:s, :]
            acc = acc + tap * wdw[ky * 3 + kx]
    dw = jnp.clip(acc + b2_ref[...], 0.0, 6.0)           # (TH, Wo, Ch_p)

    # ---- stage 3: 1x1 project (BN scale folded) + bias (+ residual) --------
    cout_p = w2_ref.shape[-1]
    o = jnp.dot(dw.reshape(TH * Wo, ch_p).astype(jnp.bfloat16), w2_ref[...],
                preferred_element_type=jnp.float32) + b3_ref[...]
    o = o.reshape(TH, Wo, cout_p)
    if use_res:                                          # stride==1, inp==oup
        # residual rows row0+1 .. row0+TH of the padded image == x_slab[1:1+TH];
        # roll-by-1 (XLU) instead of a sublane-offset slice to drop the left halo.
        xr = pltpu.roll(x_slab[1:1 + TH], shift=Wp - 1, axis=1)[:, :W, :]
        o = o + xr
    o_ref[...] = o[None].astype(o_ref.dtype)


# ------------------------------ wrapper --------------------------------------

def _fold_bn(gamma, beta, mean, var, eps=1e-5):
    scale = gamma / jnp.sqrt(var + eps)
    bias = beta - mean * scale
    return scale.astype(jnp.float32), bias.astype(jnp.float32)


def bottleneck_forward(x_nchw, params, *, inp, oup, stride, expand_ratio):
    """Fused MobileNetV2 Bottleneck forward.  x_nchw: (N, inp, H, W) f32."""
    N, _, H, W = x_nchw.shape
    hidden = int(round(inp * expand_ratio))
    do_expand = expand_ratio != 1
    use_res = (stride == 1 and inp == oup)
    Ho = (H - 1) // stride + 1
    Wo = (W - 1) // stride + 1

    cin_p = _round_up(inp, LANE)
    ch_p = _round_up(hidden, LANE)
    cout_p = _round_up(oup, LANE)
    Wp = _round_up(W + 2, SUBLANE)        # halo'd width, 8-sublane aligned
    f32 = jnp.float32
    bf16 = jnp.bfloat16

    # NCHW -> NHWC, then one small pad of the raw input: +1 row halo top and
    # bottom, +1 col halo left (right-padded up to Wp), channels to 128 lanes.
    # (In a full network, keep this padded-NHWC layout between bottlenecks.)
    x = jnp.transpose(x_nchw, (0, 2, 3, 1)).astype(f32)
    xp = jnp.pad(x, ((0, 0), (1, 1), (1, Wp - W - 1), (0, cin_p - inp)))

    args = [xp]
    # NOTE: whole halo'd image per batch element; fine at these sizes, but for
    # real MobileNet resolutions on v7x this should be a TH*s+2 row window
    # (manual DMA / element-offset indexing) so VMEM scales with TH.
    in_specs = [pl.BlockSpec((1, H + 2, Wp, cin_p), lambda n, r: (n, 0, 0, 0))]

    # Fold eval-mode BN: scale goes into the conv weight columns (stored bf16
    # for the MXU), bias stays f32 for the epilogue add.
    if do_expand:
        s1, b1 = _fold_bn(*params["bn1"])
        w1 = params["w1"].astype(f32) * s1[None, :]
        w1p = jnp.zeros((cin_p, ch_p), bf16).at[:inp, :hidden].set(w1.astype(bf16))
        b1p = jnp.zeros((1, ch_p), f32).at[:, :hidden].set(b1[None, :])
        args += [w1p, b1p]
        in_specs += [pl.BlockSpec((cin_p, ch_p), lambda n, r: (0, 0)),
                     pl.BlockSpec((1, ch_p), lambda n, r: (0, 0))]

    s2, b2 = _fold_bn(*params["bn2"])
    wdw = params["wdw"].reshape(9, hidden).astype(f32) * s2[None, :]
    wdwp = jnp.zeros((9, ch_p), f32).at[:, :hidden].set(wdw)
    b2p = jnp.zeros((1, ch_p), f32).at[:, :hidden].set(b2[None, :])

    s3, b3 = _fold_bn(*params["bn3"])
    w2 = params["w2"].astype(f32) * s3[None, :]
    w2p = jnp.zeros((ch_p, cout_p), bf16).at[:hidden, :oup].set(w2.astype(bf16))
    b3p = jnp.zeros((1, cout_p), f32).at[:, :oup].set(b3[None, :])

    args += [wdwp, b2p, w2p, b3p]
    in_specs += [pl.BlockSpec((9, ch_p), lambda n, r: (0, 0)),
                 pl.BlockSpec((1, ch_p), lambda n, r: (0, 0)),
                 pl.BlockSpec((ch_p, cout_p), lambda n, r: (0, 0)),
                 pl.BlockSpec((1, cout_p), lambda n, r: (0, 0))]

    # ---- device-aware row tiling ------------------------------------------
    # v5e/v6e have 1 TensorCore: the "parallel" grid is a sequential loop, so
    # fewest/biggest tiles win.  v7x has 2 TCs: keep >=4 parallel steps so both
    # get work, and budget the per-step working set against its 64 MiB VMEM.
    try:
        kind = jax.devices()[0].device_kind.lower()
    except Exception:  # pragma: no cover - keep the wrapper robust
        kind = ""
    multi_core = "v7" in kind
    r_target = max(1, -(-4 // N)) if multi_core else 1   # ceil(4/N) steps on v7x

    def tile_bytes(t):                                   # f32 h slab (+3 rolled
        hh = (t - 1) * stride + 3                        # copies) + accumulator
        return 4 * (4 * hh * Wp * ch_p + t * Wo * ch_p)

    budget = 24 << 20
    TH = 1
    for t in range(Ho, 0, -1):
        if Ho % t == 0 and Ho // t >= r_target and tile_bytes(t) <= budget:
            TH = t
            break
    R = Ho // TH
    vmem_limit = (32 << 20) if multi_core else (64 << 20)

    kernel = functools.partial(
        _bottleneck_kernel, H=H, W=W, Wp=Wp, TH=TH, stride=stride,
        use_res=use_res, do_expand=do_expand)

    out_p = pl.pallas_call(
        kernel,
        out_shape=jax.ShapeDtypeStruct((N, Ho, Wo, cout_p), f32),
        grid=(N, R),
        in_specs=in_specs,
        out_specs=pl.BlockSpec((1, TH, Wo, cout_p), lambda n, r: (n, r, 0, 0)),
        compiler_params=pltpu.CompilerParams(
            dimension_semantics=("parallel", "parallel"),
            vmem_limit_bytes=vmem_limit),
    )(*args)

    out = out_p[..., :oup]                     # drop the lane padding
    return jnp.transpose(out, (0, 3, 1, 2))    # NHWC -> NCHW


# ------------------------------ pure-JAX reference ---------------------------

def _ref_bottleneck(x_nchw, params, *, inp, oup, stride, expand_ratio):
    def bn(y, g, b, m, v, eps=1e-5):
        return (y - m) / jnp.sqrt(v + eps) * g + b

    x = jnp.transpose(x_nchw, (0, 2, 3, 1))
    use_res = (stride == 1 and inp == oup)
    y = x
    if expand_ratio != 1:
        y = jnp.einsum("nhwc,cd->nhwd", y, params["w1"],
                       precision=lax.Precision.HIGHEST)
        y = jnp.clip(bn(y, *params["bn1"]), 0.0, 6.0)
    hidden = y.shape[-1]
    w_hwio = params["wdw"].reshape(3, 3, 1, hidden)
    y = lax.conv_general_dilated(
        y, w_hwio, window_strides=(stride, stride),
        padding=((1, 1), (1, 1)),
        dimension_numbers=("NHWC", "HWIO", "NHWC"),
        feature_group_count=hidden,
        precision=lax.Precision.HIGHEST)
    y = jnp.clip(bn(y, *params["bn2"]), 0.0, 6.0)
    y = jnp.einsum("nhwc,cd->nhwd", y, params["w2"],
                   precision=lax.Precision.HIGHEST)
    y = bn(y, *params["bn3"])
    if use_res:
        y = y + x
    return jnp.transpose(y, (0, 3, 1, 2))


# ---------------------------------- main -------------------------------------

if __name__ == "__main__":
    # Bottleneck(inp=4, oup=4, stride=1, expand_ratio=6) -> hidden_dim = 24,
    # use_res_connect = True.
    N, inp, H, W = 2, 4, 16, 16
    oup, stride, expand_ratio = 4, 1, 6
    hidden = int(round(inp * expand_ratio))

    key = jax.random.PRNGKey(0)
    keys = jax.random.split(key, 8)
    x_nchw = jax.random.normal(keys[0], (N, inp, H, W), jnp.float32)

    def bn_params(k, c):
        k1, k2, k3, k4 = jax.random.split(k, 4)
        gamma = jax.random.uniform(k1, (c,), jnp.float32, 0.5, 1.5)
        beta = jax.random.normal(k2, (c,), jnp.float32) * 0.1
        mean = jax.random.normal(k3, (c,), jnp.float32) * 0.1
        var = jax.random.uniform(k4, (c,), jnp.float32, 0.5, 1.5)
        return gamma, beta, mean, var

    params = {
        # torch Conv2d weight (hidden, inp, 1, 1) stored here as (inp, hidden)
        "w1": jax.random.normal(keys[1], (inp, hidden), jnp.float32) * 0.1,
        # torch depthwise weight (hidden, 1, 3, 3) stored as (3, 3, hidden)
        "wdw": jax.random.normal(keys[2], (3, 3, hidden), jnp.float32) * 0.1,
        # torch Conv2d weight (oup, hidden, 1, 1) stored as (hidden, oup)
        "w2": jax.random.normal(keys[3], (hidden, oup), jnp.float32) * 0.1,
        "bn1": bn_params(keys[4], hidden),   # eval-mode BN (running stats)
        "bn2": bn_params(keys[5], hidden),
        "bn3": bn_params(keys[6], oup),
    }

    fwd = jax.jit(functools.partial(bottleneck_forward, inp=inp, oup=oup,
                                    stride=stride, expand_ratio=expand_ratio))
    out = jax.block_until_ready(fwd(x_nchw, params))

    ref = jax.block_until_ready(
        _ref_bottleneck(x_nchw, params, inp=inp, oup=oup,
                        stride=stride, expand_ratio=expand_ratio))

    assert out.shape == (N, oup, H, W), out.shape
    # Kernel matmuls run with explicit bf16 operands on the MXU (the previous
    # default-precision path already truncated to bf16), reference is HIGHEST.
    assert jnp.allclose(out, ref, rtol=1e-2, atol=1e-2), (
        float(jnp.max(jnp.abs(out - ref))))
    print("KERNEL_OK")
</pallas_src>

<mosaic_0001>
module attributes {stable_mosaic.version = 11 : i64} {
  func.func @_bottleneck_kernel(%arg0: i32, %arg1: i32, %arg2: memref<1x18x24x128xf32, #tpu.memory_space<vmem>>, %arg3: memref<128x128xbf16, #tpu.memory_space<vmem>>, %arg4: memref<1x128xf32, #tpu.memory_space<vmem>>, %arg5: memref<9x128xf32, #tpu.memory_space<vmem>>, %arg6: memref<1x128xf32, #tpu.memory_space<vmem>>, %arg7: memref<128x128xbf16, #tpu.memory_space<vmem>>, %arg8: memref<1x128xf32, #tpu.memory_space<vmem>>, %arg9: memref<1x16x16x128xf32, #tpu.memory_space<vmem>>) attributes {dimension_semantics = [#tpu.dimension_semantics<parallel>, #tpu.dimension_semantics<parallel>], iteration_bounds = array<i64: 2, 1>, scalar_prefetch = 0 : i64, scratch_operands = 0 : i64, tpu.core_type = #tpu.core_type<tc>, window_params = [{transform_indices = @transform_0, window_bounds = array<i64: 1, 18, 24, 128>}, {pipeline_mode = #tpu.pipeline_mode<synchronous>, transform_indices = @transform_1, window_bounds = array<i64: 128, 128>}, {pipeline_mode = #tpu.pipeline_mode<synchronous>, transform_indices = @transform_2, window_bounds = array<i64: 1, 128>}, {pipeline_mode = #tpu.pipeline_mode<synchronous>, transform_indices = @transform_3, window_bounds = array<i64: 9, 128>}, {pipeline_mode = #tpu.pipeline_mode<synchronous>, transform_indices = @transform_4, window_bounds = array<i64: 1, 128>}, {pipeline_mode = #tpu.pipeline_mode<synchronous>, transform_indices = @transform_5, window_bounds = array<i64: 128, 128>}, {pipeline_mode = #tpu.pipeline_mode<synchronous>, transform_indices = @transform_6, window_bounds = array<i64: 1, 128>}, {transform_indices = @transform_7, window_bounds = array<i64: 1, 16, 16, 128>}]} {
    %c16_i32 = arith.constant 16 : i32
    %0 = arith.muli %arg1, %c16_i32 : i32
    %1 = tpu.assume_multiple %0, 16 : i32
    %c0 = arith.constant 0 : index
    %2 = arith.index_cast %1 : i32 to index
    %c0_0 = arith.constant 0 : index
    %c0_1 = arith.constant 0 : index
    %3 = vector.load %arg2[%c0, %2, %c0_0, %c0_1] : memref<1x18x24x128xf32, #tpu.memory_space<vmem>>, vector<1x18x24x128xf32>
    %4 = vector.shape_cast %3 : vector<1x18x24x128xf32> to vector<18x24x128xf32>
    %5 = vector.shape_cast %4 : vector<18x24x128xf32> to vector<432x128xf32>
    %6 = arith.truncf %5 : vector<432x128xf32> to vector<432x128xbf16>
    %c0_2 = arith.constant 0 : index
    %c0_3 = arith.constant 0 : index
    %7 = vector.load %arg3[%c0_2, %c0_3] : memref<128x128xbf16, #tpu.memory_space<vmem>>, vector<128x128xbf16>
    %cst = arith.constant dense<0.000000e+00> : vector<432x128xf32>
    %8 = tpu.matmul %6, %7, %cst {dimension_numbers = #tpu.dot_dimension_numbers<[1], [0], [0], [1], [0, 0, 1, 1], [], []>} : vector<432x128xbf16>, vector<128x128xbf16>, vector<432x128xf32> -> vector<432x128xf32>
    %c0_4 = arith.constant 0 : index
    %c0_5 = arith.constant 0 : index
    %9 = vector.load %arg4[%c0_4, %c0_5] : memref<1x128xf32, #tpu.memory_space<vmem>>, vector<1x128xf32>
    %10 = vector.broadcast %9 : vector<1x128xf32> to vector<432x128xf32>
    %11 = arith.addf %8, %10 : vector<432x128xf32>
    %cst_6 = arith.constant 0.000000e+00 : f32
    %cst_7 = arith.constant 6.000000e+00 : f32
    %12 = vector.broadcast %cst_6 : f32 to vector<432x128xf32>
    %13 = arith.maximumf %12, %11 : vector<432x128xf32>
    %14 = vector.broadcast %cst_7 : f32 to vector<432x128xf32>
    %15 = arith.minimumf %14, %13 : vector<432x128xf32>
    %16 = vector.shape_cast %15 : vector<432x128xf32> to vector<18x24x128xf32>
    %17 = tpu.iota {dimensions = array<i32: 0>} : vector<18x24x1xi32>
    %18 = vector.broadcast %1 : i32 to vector<18x24x1xi32>
    %19 = arith.addi %18, %17 : vector<18x24x1xi32>
    %20 = tpu.iota {dimensions = array<i32: 1>} : vector<18x24x1xi32>
    %c1_i32 = arith.constant 1 : i32
    %21 = vector.broadcast %c1_i32 : i32 to vector<18x24x1xi32>
    %22 = arith.cmpi sge, %19, %21 : vector<18x24x1xi32>
    %c16_i32_8 = arith.constant 16 : i32
    %23 = vector.broadcast %c16_i32_8 : i32 to vector<18x24x1xi32>
    %24 = arith.cmpi sle, %19, %23 : vector<18x24x1xi32>
    %25 = arith.andi %22, %24 : vector<18x24x1xi1>
    %c1_i32_9 = arith.constant 1 : i32
    %26 = vector.broadcast %c1_i32_9 : i32 to vector<18x24x1xi32>
    %27 = arith.cmpi sge, %20, %26 : vector<18x24x1xi32>
    %28 = arith.andi %25, %27 : vector<18x24x1xi1>
    %c16_i32_10 = arith.constant 16 : i32
    %29 = vector.broadcast %c16_i32_10 : i32 to vector<18x24x1xi32>
    %30 = arith.cmpi sle, %20, %29 : vector<18x24x1xi32>
    %31 = arith.andi %28, %30 : vector<18x24x1xi1>
    %cst_11 = arith.constant 0.000000e+00 : f32
    %32 = vector.shape_cast %31 : vector<18x24x1xi1> to vector<18x24x1xi1>
    %33 = vector.broadcast %32 : vector<18x24x1xi1> to vector<18x24x128xi1>
    %34 = vector.broadcast %cst_11 : f32 to vector<18x24x128xf32>
    %35 = arith.select %33, %16, %34 : vector<18x24x128xi1>, vector<18x24x128xf32>
    %c0_12 = arith.constant 0 : index
    %c0_13 = arith.constant 0 : index
    %36 = vector.load %arg5[%c0_12, %c0_13] : memref<9x128xf32, #tpu.memory_space<vmem>>, vector<9x128xf32>
    %cst_14 = arith.constant 0.000000e+00 : f32
    %37 = vector.broadcast %cst_14 : f32 to vector<16x16x128xf32>
    %38 = vector.extract_strided_slice %35 {offsets = [0, 0, 0], sizes = [16, 16, 128], strides = [1, 1, 1]} : vector<18x24x128xf32> to vector<16x16x128xf32>
    %39 = vector.extract_strided_slice %36 {offsets = [0, 0], sizes = [1, 128], strides = [1, 1]} : vector<9x128xf32> to vector<1x128xf32>
    %40 = vector.shape_cast %39 : vector<1x128xf32> to vector<128xf32>
    %41 = vector.shape_cast %40 : vector<128xf32> to vector<1x1x128xf32>
    %42 = vector.broadcast %41 : vector<1x1x128xf32> to vector<16x16x128xf32>
    %43 = arith.mulf %38, %42 : vector<16x16x128xf32>
    %44 = arith.addf %37, %43 : vector<16x16x128xf32>
    %45 = vector.extract_strided_slice %35 {offsets = [1, 0, 0], sizes = [16, 16, 128], strides = [1, 1, 1]} : vector<18x24x128xf32> to vector<16x16x128xf32>
    %46 = vector.extract_strided_slice %36 {offsets = [3, 0], sizes = [1, 128], strides = [1, 1]} : vector<9x128xf32> to vector<1x128xf32>
    %47 = vector.shape_cast %46 : vector<1x128xf32> to vector<128xf32>
    %48 = vector.shape_cast %47 : vector<128xf32> to vector<1x1x128xf32>
    %49 = vector.broadcast %48 : vector<1x1x128xf32> to vector<16x16x128xf32>
    %50 = arith.mulf %45, %49 : vector<16x16x128xf32>
    %51 = arith.addf %44, %50 : vector<16x16x128xf32>
    %52 = vector.extract_strided_slice %35 {offsets = [2, 0, 0], sizes = [16, 16, 128], strides = [1, 1, 1]} : vector<18x24x128xf32> to vector<16x16x128xf32>
    %53 = vector.extract_strided_slice %36 {offsets = [6, 0], sizes = [1, 128], strides = [1, 1]} : vector<9x128xf32> to vector<1x128xf32>
    %54 = vector.shape_cast %53 : vector<1x128xf32> to vector<128xf32>
    %55 = vector.shape_cast %54 : vector<128xf32> to vector<1x1x128xf32>
    %56 = vector.broadcast %55 : vector<1x1x128xf32> to vector<16x16x128xf32>
    %57 = arith.mulf %52, %56 : vector<16x16x128xf32>
    %58 = arith.addf %51, %57 : vector<16x16x128xf32>
    %c23_i32 = arith.constant 23 : i32
    %59 = tpu.dynamic_rotate %35 by %c23_i32 dim 1 : vector<18x24x128xf32>, i32 -> vector<18x24x128xf32>
    %60 = vector.extract_strided_slice %59 {offsets = [0, 0, 0], sizes = [16, 16, 128], strides = [1, 1, 1]} : vector<18x24x128xf32> to vector<16x16x128xf32>
    %61 = vector.extract_strided_slice %36 {offsets = [1, 0], sizes = [1, 128], strides = [1, 1]} : vector<9x128xf32> to vector<1x128xf32>
    %62 = vector.shape_cast %61 : vector<1x128xf32> to vector<128xf32>
    %63 = vector.shape_cast %62 : vector<128xf32> to vector<1x1x128xf32>
    %64 = vector.broadcast %63 : vector<1x1x128xf32> to vector<16x16x128xf32>
    %65 = arith.mulf %60, %64 : vector<16x16x128xf32>
    %66 = arith.addf %58, %65 : vector<16x16x128xf32>
    %67 = vector.extract_strided_slice %59 {offsets = [1, 0, 0], sizes = [16, 16, 128], strides = [1, 1, 1]} : vector<18x24x128xf32> to vector<16x16x128xf32>
    %68 = vector.extract_strided_slice %36 {offsets = [4, 0], sizes = [1, 128], strides = [1, 1]} : vector<9x128xf32> to vector<1x128xf32>
    %69 = vector.shape_cast %68 : vector<1x128xf32> to vector<128xf32>
    %70 = vector.shape_cast %69 : vector<128xf32> to vector<1x1x128xf32>
    %71 = vector.broadcast %70 : vector<1x1x128xf32> to vector<16x16x128xf32>
    %72 = arith.mulf %67, %71 : vector<16x16x128xf32>
    %73 = arith.addf %66, %72 : vector<16x16x128xf32>
    %74 = vector.extract_strided_slice %59 {offsets = [2, 0, 0], sizes = [16, 16, 128], strides = [1, 1, 1]} : vector<18x24x128xf32> to vector<16x16x128xf32>
    %75 = vector.extract_strided_slice %36 {offsets = [7, 0], sizes = [1, 128], strides = [1, 1]} : vector<9x128xf32> to vector<1x128xf32>
    %76 = vector.shape_cast %75 : vector<1x128xf32> to vector<128xf32>
    %77 = vector.shape_cast %76 : vector<128xf32> to vector<1x1x128xf32>
    %78 = vector.broadcast %77 : vector<1x1x128xf32> to vector<16x16x128xf32>
    %79 = arith.mulf %74, %78 : vector<16x16x128xf32>
    %80 = arith.addf %73, %79 : vector<16x16x128xf32>
    %c22_i32 = arith.constant 22 : i32
    %81 = tpu.dynamic_rotate %35 by %c22_i32 dim 1 : vector<18x24x128xf32>, i32 -> vector<18x24x128xf32>
    %82 = vector.extract_strided_slice %81 {offsets = [0, 0, 0], sizes = [16, 16, 128], strides = [1, 1, 1]} : vector<18x24x128xf32> to vector<16x16x128xf32>
    %83 = vector.extract_strided_slice %36 {offsets = [2, 0], sizes = [1, 128], strides = [1, 1]} : vector<9x128xf32> to vector<1x128xf32>
    %84 = vector.shape_cast %83 : vector<1x128xf32> to vector<128xf32>
    %85 = vector.shape_cast %84 : vector<128xf32> to vector<1x1x128xf32>
    %86 = vector.broadcast %85 : vector<1x1x128xf32> to vector<16x16x128xf32>
    %87 = arith.mulf %82, %86 : vector<16x16x128xf32>
    %88 = arith.addf %80, %87 : vector<16x16x128xf32>
    %89 = vector.extract_strided_slice %81 {offsets = [1, 0, 0], sizes = [16, 16, 128], strides = [1, 1, 1]} : vector<18x24x128xf32> to vector<16x16x128xf32>
    %90 = vector.extract_strided_slice %36 {offsets = [5, 0], sizes = [1, 128], strides = [1, 1]} : vector<9x128xf32> to vector<1x128xf32>
    %91 = vector.shape_cast %90 : vector<1x128xf32> to vector<128xf32>
    %92 = vector.shape_cast %91 : vector<128xf32> to vector<1x1x128xf32>
    %93 = vector.broadcast %92 : vector<1x1x128xf32> to vector<16x16x128xf32>
    %94 = arith.mulf %89, %93 : vector<16x16x128xf32>
    %95 = arith.addf %88, %94 : vector<16x16x128xf32>
    %96 = vector.extract_strided_slice %81 {offsets = [2, 0, 0], sizes = [16, 16, 128], strides = [1, 1, 1]} : vector<18x24x128xf32> to vector<16x16x128xf32>
    %97 = vector.extract_strided_slice %36 {offsets = [8, 0], sizes = [1, 128], strides = [1, 1]} : vector<9x128xf32> to vector<1x128xf32>
    %98 = vector.shape_cast %97 : vector<1x128xf32> to vector<128xf32>
    %99 = vector.shape_cast %98 : vector<128xf32> to vector<1x1x128xf32>
    %100 = vector.broadcast %99 : vector<1x1x128xf32> to vector<16x16x128xf32>
    %101 = arith.mulf %96, %100 : vector<16x16x128xf32>
    %102 = arith.addf %95, %101 : vector<16x16x128xf32>
    %c0_15 = arith.constant 0 : index
    %c0_16 = arith.constant 0 : index
    %103 = vector.load %arg6[%c0_15, %c0_16] : memref<1x128xf32, #tpu.memory_space<vmem>>, vector<1x128xf32>
    %104 = vector.shape_cast %103 : vector<1x128xf32> to vector<1x1x128xf32>
    %105 = vector.broadcast %104 : vector<1x1x128xf32> to vector<16x16x128xf32>
    %106 = arith.addf %102, %105 : vector<16x16x128xf32>
    %cst_17 = arith.constant 0.000000e+00 : f32
    %cst_18 = arith.constant 6.000000e+00 : f32
    %107 = vector.broadcast %cst_17 : f32 to vector<16x16x128xf32>
    %108 = arith.maximumf %107, %106 : vector<16x16x128xf32>
    %109 = vector.broadcast %cst_18 : f32 to vector<16x16x128xf32>
    %110 = arith.minimumf %109, %108 : vector<16x16x128xf32>
    %111 = vector.shape_cast %110 : vector<16x16x128xf32> to vector<256x128xf32>
    %112 = arith.truncf %111 : vector<256x128xf32> to vector<256x128xbf16>
    %c0_19 = arith.constant 0 : index
    %c0_20 = arith.constant 0 : index
    %113 = vector.load %arg7[%c0_19, %c0_20] : memref<128x128xbf16, #tpu.memory_space<vmem>>, vector<128x128xbf16>
    %cst_21 = arith.constant dense<0.000000e+00> : vector<256x128xf32>
    %114 = tpu.matmul %112, %113, %cst_21 {dimension_numbers = #tpu.dot_dimension_numbers<[1], [0], [0], [1], [0, 0, 1, 1], [], []>} : vector<256x128xbf16>, vector<128x128xbf16>, vector<256x128xf32> -> vector<256x128xf32>
    %c0_22 = arith.constant 0 : index
    %c0_23 = arith.constant 0 : index
    %115 = vector.load %arg8[%c0_22, %c0_23] : memref<1x128xf32, #tpu.memory_space<vmem>>, vector<1x128xf32>
    %116 = vector.broadcast %115 : vector<1x128xf32> to vector<256x128xf32>
    %117 = arith.addf %114, %116 : vector<256x128xf32>
    %118 = vector.shape_cast %117 : vector<256x128xf32> to vector<16x16x128xf32>
    %119 = vector.extract_strided_slice %4 {offsets = [1, 0, 0], sizes = [16, 24, 128], strides = [1, 1, 1]} : vector<18x24x128xf32> to vector<16x24x128xf32>
    %c23_i32_24 = arith.constant 23 : i32
    %120 = tpu.dynamic_rotate %119 by %c23_i32_24 dim 1 : vector<16x24x128xf32>, i32 -> vector<16x24x128xf32>
    %121 = vector.extract_strided_slice %120 {offsets = [0, 0, 0], sizes = [16, 16, 128], strides = [1, 1, 1]} : vector<16x24x128xf32> to vector<16x16x128xf32>
    %122 = arith.addf %118, %121 : vector<16x16x128xf32>
    %123 = vector.shape_cast %122 : vector<16x16x128xf32> to vector<1x16x16x128xf32>
    %c0_25 = arith.constant 0 : index
    %c0_26 = arith.constant 0 : index
    %c0_27 = arith.constant 0 : index
    %c0_28 = arith.constant 0 : index
    %124 = vector.load %arg9[%c0_25, %c0_26, %c0_27, %c0_28] : memref<1x16x16x128xf32, #tpu.memory_space<vmem>>, vector<1x16x16x128xf32>
    tpu.vector_store %arg9[%c0_25, %c0_26, %c0_27, %c0_28], %123 {strides = array<i32>} : memref<1x16x16x128xf32, #tpu.memory_space<vmem>>, vector<1x16x16x128xf32>,
    return
  }
  func.func @transform_0(%arg0: i32, %arg1: i32) -> (i32, i32, i32, i32) {
    %c0_i32 = arith.constant 0 : i32
    %c0_i32_0 = arith.constant 0 : i32
    %c0_i32_1 = arith.constant 0 : i32
    %c0_i32_2 = arith.constant 0 : i32
    return %arg0, %c0_i32, %c0_i32_0, %c0_i32_1 : i32, i32, i32, i32
  }
  func.func @transform_1(%arg0: i32, %arg1: i32) -> (i32, i32) {
    %c0_i32 = arith.constant 0 : i32
    %c0_i32_0 = arith.constant 0 : i32
    %c0_i32_1 = arith.constant 0 : i32
    return %c0_i32, %c0_i32_0 : i32, i32
  }
  func.func @transform_2(%arg0: i32, %arg1: i32) -> (i32, i32) {
    %c0_i32 = arith.constant 0 : i32
    %c0_i32_0 = arith.constant 0 : i32
    %c0_i32_1 = arith.constant 0 : i32
    return %c0_i32, %c0_i32_0 : i32, i32
  }
  func.func @transform_3(%arg0: i32, %arg1: i32) -> (i32, i32) {
    %c0_i32 = arith.constant 0 : i32
    %c0_i32_0 = arith.constant 0 : i32
    %c0_i32_1 = arith.constant 0 : i32
    return %c0_i32, %c0_i32_0 : i32, i32
  }
  func.func @transform_4(%arg0: i32, %arg1: i32) -> (i32, i32) {
    %c0_i32 = arith.constant 0 : i32
    %c0_i32_0 = arith.constant 0 : i32
    %c0_i32_1 = arith.constant 0 : i32
    return %c0_i32, %c0_i32_0 : i32, i32
  }
  func.func @transform_5(%arg0: i32, %arg1: i32) -> (i32, i32) {
    %c0_i32 = arith.constant 0 : i32
    %c0_i32_0 = arith.constant 0 : i32
    %c0_i32_1 = arith.constant 0 : i32
    return %c0_i32, %c0_i32_0 : i32, i32
  }
  func.func @transform_6(%arg0: i32, %arg1: i32) -> (i32, i32) {
    %c0_i32 = arith.constant 0 : i32
    %c0_i32_0 = arith.constant 0 : i32
    %c0_i32_1 = arith.constant 0 : i32
    return %c0_i32, %c0_i32_0 : i32, i32
  }
  func.func @transform_7(%arg0: i32, %arg1: i32) -> (i32, i32, i32, i32) {
    %c0_i32 = arith.constant 0 : i32
    %c0_i32_0 = arith.constant 0 : i32
    %c0_i32_1 = arith.constant 0 : i32
    return %arg0, %arg1, %c0_i32, %c0_i32_0 : i32, i32, i32, i32
  }
}

</mosaic_0001>

<llo_original>
// kernel: bottleneck_forward.1
$region0: #{bottleneck_forward.1}
  #allocation0 [shape = 'u32[]', space=smem, size = 0x4, offset = 0x4, fixed_abs, tag = 'smem constant byte address 0x4 - core index']
  #allocation1 [shape = 'u32[144,128]{1,0:T(1,128)}', space=vmem, size = 0x12000, scoped, tag = 'internal scratch']
  %s0 = inlined_call_operand.hbm [shape: f32[2,18,24,128], index: 0, kind: input, shape index: {}]
  %s1 = inlined_call_operand.hbm [shape: bf16[128,128], index: 1, kind: input, shape index: {}]
  %s2 = inlined_call_operand.hbm [shape: f32[1,128], index: 2, kind: input, shape index: {}]
  %s3 = inlined_call_operand.hbm [shape: f32[9,128], index: 3, kind: input, shape index: {}]
  %s4 = inlined_call_operand.hbm [shape: f32[1,128], index: 4, kind: input, shape index: {}]
  %s5 = inlined_call_operand.hbm [shape: bf16[128,128], index: 5, kind: input, shape index: {}]
  %s6 = inlined_call_operand.hbm [shape: f32[1,128], index: 6, kind: input, shape index: {}]
  %s7 = inlined_call_operand.hbm [shape: f32[2,16,16,128], index: 7, kind: output, shape index: {}]
  %s8 = sld [smem:[#allocation0]]
  $region89: #{bottleneck_forward.1} parent=0
    _
  %s10 = ssub.s32 1, %s8
  %s11 = scalar_select 0, %s10, %s8
  $region1: #{bottleneck_forward.1} parent=0
    #allocation2 [shape = 'u8[442368]{0}', space=vmem, size = 0x6c000, scoped, tag = 'input window, operand 0']
    #allocation3 [shape = 's32[2]{0}', space=sflag, size = 0x8, scoped, tag = 'scoped memory for bottleneck_forward.1']
    #allocation4 [shape = 's32[2]{0}', space=sflag, size = 0x8, scoped, tag = 'scoped memory for bottleneck_forward.1']
    #allocation5 [shape = 'u8[32768]{0}', space=vmem, size = 0x8000, scoped, tag = 'input window, operand 1, single buffered']
    #allocation6 [shape = 's32[1]{0}', space=sflag, size = 0x4, scoped, tag = 'scoped memory for bottleneck_forward.1']
    #allocation7 [shape = 'u8[512]{0}', space=vmem, size = 0x400, scoped, tag = 'input window, operand 2, single buffered']
    #allocation8 [shape = 'u8[8192]{0}', space=vmem, size = 0x2000, scoped, tag = 'input window, operand 3, single buffered']
    #allocation9 [shape = 's32[1]{0}', space=sflag, size = 0x4, scoped, tag = 'scoped memory for bottleneck_forward.1']
    #allocation10 [shape = 'u8[512]{0}', space=vmem, size = 0x400, scoped, tag = 'input window, operand 4, single buffered']
    #allocation11 [shape = 'u8[32768]{0}', space=vmem, size = 0x8000, scoped, tag = 'input window, operand 5, single buffered']
    #allocation12 [shape = 's32[1]{0}', space=sflag, size = 0x4, scoped, tag = 'scoped memory for bottleneck_forward.1']
    #allocation13 [shape = 'u8[512]{0}', space=vmem, size = 0x400, scoped, tag = 'input window, operand 6, single buffered']
    #allocation14 [shape = 'u8[262144]{0}', space=vmem, size = 0x40000, scoped, tag = 'output window, operand 0']
    %12 = vsyncpa [#allocation3], 0
    %s13 = scalar_lea.sflag [#allocation3], 1
    %14 = vsyncpa %s13, 0
    %15 = vsyncpa [#allocation6], 0
    %16 = vsyncpa [#allocation9], 0
    %17 = vsyncpa [#allocation12], 0
    %18 = vsyncpa [#allocation4], 0
    %s19 = scalar_lea.sflag [#allocation4], 1
    %20 = vsyncpa %s19, 0
    loop: start=0, step=1, limit=4
    $region2: #{bottleneck_forward.1} parent=1 // loop_pre_header
      _
    $region3: #{bottleneck_forward.1} parent=1 // loop_header
      %s22 = sphi 0, %s26
      %p23 = scmp.ge.s32.totalorder %s22, 4
      %s29 = sphi 0, %s41
      %s30 = sphi 0, %s37
      %s31 = sphi 0, %s29
      %s32 = sphi 0, %s30
      %s33 = sphi 0, %s31
      %s34 = sphi 0, %s32
      %s44 = sphi 0, %s46
      %s47 = sphi 0, %s44
      %s48 = sphi 0, %s47
      %s64 = sphi 0, %s48
      %s68 = sphi 0, %s68
      %s70 = sphi 0, %s68
      %s71 = sphi 0, %s70
      %s85 = sphi 0, %s71
      %s89 = sphi 0, %s89
      %s91 = sphi 0, %s89
      %s92 = sphi 0, %s91
      %s106 = sphi 0, %s92
      %s110 = sphi 0, %s110
      %s112 = sphi 0, %s110
      %s113 = sphi 0, %s112
      %s127 = sphi 0, %s113
      %s131 = sphi 0, %s131
      %s133 = sphi 0, %s131
      %s134 = sphi 0, %s133
      %s148 = sphi 0, %s134
      %s152 = sphi 0, %s152
      %s154 = sphi 0, %s152
      %s155 = sphi 0, %s154
      %s169 = sphi 0, %s155
      %s173 = sphi 0, %s173
      %s175 = sphi 0, %s173
      %s176 = sphi 0, %s175
      %s190 = sphi 0, %s176
      %s198 = sphi 0, %s200
      %s201 = sphi 0, %s198
      %s202 = sphi 0, %s201
      %s218 = sphi 0, %s202
    $region4: #{bottleneck_forward.1} parent=1 // loop_header_branch
      %25 = sbr.rel (%p23) target = $region8
    $region5: #{bottleneck_forward.1} parent=1 // loop_body
      %s27 = ssub.s32 %s22, 1
      %s28 = ssub.s32 %s22, 2
      %s35 = sadd.s32 1, %s30
      %p36 = scmp.ge.s32.totalorder %s35, 1
      %s37 = scalar_select %p36, 0, %s35
      %s38 = sadd.s32 1, %s29
      %s39 = scalar_select %p36, %s38, %s29
      %p40 = scmp.ge.s32.totalorder %s39, 2
      %s41 = scalar_select %p40, 0, %s39
      %s42 = ssub.s32 %s29, %s41
      %p43 = scmp.eq.s32.totalorder %s42, 0
      %s45 = sadd.s32 %s44, 1
      %s46 = scalar_select %p43, %s44, %s45
      %p49 = pneg %p43
      %p50 = scmp.eq.s32.totalorder %s22, 1
      %p51 = por %p49, %p50
      %p52 = scmp.ne.s32.totalorder %s44, %s47
      %p53 = scmp.eq.s32.totalorder %s22, 0
      %p54 = por %p52, %p53
      %p55 = scmp.ne.s32.totalorder %s44, %s47
      %p56 = scmp.eq.s32.totalorder %s27, 1
      %p57 = por %p55, %p56
      %p58 = scmp.ne.s32.totalorder %s47, %s48
      %p59 = scmp.eq.s32.totalorder %s27, 0
      %p60 = por %p58, %p59
      %p61 = scmp.ne.s32.totalorder %s47, %s48
      %p62 = scmp.eq.s32.totalorder %s28, 1
      %p63 = por %p61, %p62
      %p65 = scmp.ne.s32.totalorder %s48, %s64
      %p66 = scmp.eq.s32.totalorder %s28, 0
      %p67 = por %p65, %p66
      %s69 = sadd.s32 %s68, 1
      %p72 = scmp.eq.s32.totalorder %s22, 1
      %p73 = scmp.ne.s32.totalorder %s68, %s70
      %p74 = scmp.eq.s32.totalorder %s22, 0
      %p75 = por %p73, %p74
      %p76 = scmp.ne.s32.totalorder %s68, %s70
      %p77 = scmp.eq.s32.totalorder %s27, 1
      %p78 = por %p76, %p77
      %p79 = scmp.ne.s32.totalorder %s70, %s71
      %p80 = scmp.eq.s32.totalorder %s27, 0
      %p81 = por %p79, %p80
      %p82 = scmp.ne.s32.totalorder %s70, %s71
      %p83 = scmp.eq.s32.totalorder %s28, 1
      %p84 = por %p82, %p83
      %p86 = scmp.ne.s32.totalorder %s71, %s85
      %p87 = scmp.eq.s32.totalorder %s28, 0
      %p88 = por %p86, %p87
      %s90 = sadd.s32 %s89, 1
      %p93 = scmp.eq.s32.totalorder %s22, 1
      %p94 = scmp.ne.s32.totalorder %s89, %s91
      %p95 = scmp.eq.s32.totalorder %s22, 0
      %p96 = por %p94, %p95
      %p97 = scmp.ne.s32.totalorder %s89, %s91
      %p98 = scmp.eq.s32.totalorder %s27, 1
      %p99 = por %p97, %p98
      %p100 = scmp.ne.s32.totalorder %s91, %s92
      %p101 = scmp.eq.s32.totalorder %s27, 0
      %p102 = por %p100, %p101
      %p103 = scmp.ne.s32.totalorder %s91, %s92
      %p104 = scmp.eq.s32.totalorder %s28, 1
      %p105 = por %p103, %p104
      %p107 = scmp.ne.s32.totalorder %s92, %s106
      %p108 = scmp.eq.s32.totalorder %s28, 0
      %p109 = por %p107, %p108
      %s111 = sadd.s32 %s110, 1
      %p114 = scmp.eq.s32.totalorder %s22, 1
      %p115 = scmp.ne.s32.totalorder %s110, %s112
      %p116 = scmp.eq.s32.totalorder %s22, 0
      %p117 = por %p115, %p116
      %p118 = scmp.ne.s32.totalorder %s110, %s112
      %p119 = scmp.eq.s32.totalorder %s27, 1
      %p120 = por %p118, %p119
      %p121 = scmp.ne.s32.totalorder %s112, %s113
      %p122 = scmp.eq.s32.totalorder %s27, 0
      %p123 = por %p121, %p122
      %p124 = scmp.ne.s32.totalorder %s112, %s113
      %p125 = scmp.eq.s32.totalorder %s28, 1
      %p126 = por %p124, %p125
      %p128 = scmp.ne.s32.totalorder %s113, %s127
      %p129 = scmp.eq.s32.totalorder %s28, 0
      %p130 = por %p128, %p129
      %s132 = sadd.s32 %s131, 1
      %p135 = scmp.eq.s32.totalorder %s22, 1
      %p136 = scmp.ne.s32.totalorder %s131, %s133
      %p137 = scmp.eq.s32.totalorder %s22, 0
      %p138 = por %p136, %p137
      %p139 = scmp.ne.s32.totalorder %s131, %s133
      %p140 = scmp.eq.s32.totalorder %s27, 1
      %p141 = por %p139, %p140
      %p142 = scmp.ne.s32.totalorder %s133, %s134
      %p143 = scmp.eq.s32.totalorder %s27, 0
      %p144 = por %p142, %p143
      %p145 = scmp.ne.s32.totalorder %s133, %s134
      %p146 = scmp.eq.s32.totalorder %s28, 1
      %p147 = por %p145, %p146
      %p149 = scmp.ne.s32.totalorder %s134, %s148
      %p150 = scmp.eq.s32.totalorder %s28, 0
      %p151 = por %p149, %p150
      %s153 = sadd.s32 %s152, 1
      %p156 = scmp.eq.s32.totalorder %s22, 1
      %p157 = scmp.ne.s32.totalorder %s152, %s154
      %p158 = scmp.eq.s32.totalorder %s22, 0
      %p159 = por %p157, %p158
      %p160 = scmp.ne.s32.totalorder %s152, %s154
      %p161 = scmp.eq.s32.totalorder %s27, 1
      %p162 = por %p160, %p161
      %p163 = scmp.ne.s32.totalorder %s154, %s155
      %p164 = scmp.eq.s32.totalorder %s27, 0
      %p165 = por %p163, %p164
      %p166 = scmp.ne.s32.totalorder %s154, %s155
      %p167 = scmp.eq.s32.totalorder %s28, 1
      %p168 = por %p166, %p167
      %p170 = scmp.ne.s32.totalorder %s155, %s169
      %p171 = scmp.eq.s32.totalorder %s28, 0
      %p172 = por %p170, %p171
      %s174 = sadd.s32 %s173, 1
      %p177 = scmp.eq.s32.totalorder %s22, 1
      %p178 = scmp.ne.s32.totalorder %s173, %s175
      %p179 = scmp.eq.s32.totalorder %s22, 0
      %p180 = por %p178, %p179
      %p181 = scmp.ne.s32.totalorder %s173, %s175
      %p182 = scmp.eq.s32.totalorder %s27, 1
      %p183 = por %p181, %p182
      %p184 = scmp.ne.s32.totalorder %s175, %s176
      %p185 = scmp.eq.s32.totalorder %s27, 0
      %p186 = por %p184, %p185
      %p187 = scmp.ne.s32.totalorder %s175, %s176
      %p188 = scmp.eq.s32.totalorder %s28, 1
      %p189 = por %p187, %p188
      %p191 = scmp.ne.s32.totalorder %s176, %s190
      %p192 = scmp.eq.s32.totalorder %s28, 0
      %p193 = por %p191, %p192
      %s194 = ssub.s32 %s29, %s41
      %s195 = ssub.s32 %s30, %s37
      %s196 = sor.u32 %s194, %s195
      %p197 = scmp.eq.s32.totalorder %s196, 0
      %s199 = sadd.s32 %s198, 1
      %s200 = scalar_select %p197, %s198, %s199
      %p203 = pneg %p197
      %p204 = scmp.eq.s32.totalorder %s22, 1
      %p205 = por %p203, %p204
      %p206 = scmp.ne.s32.totalorder %s198, %s201
      %p207 = scmp.eq.s32.totalorder %s22, 0
      %p208 = por %p206, %p207
      %p209 = scmp.ne.s32.totalorder %s198, %s201
      %p210 = scmp.eq.s32.totalorder %s27, 1
      %p211 = por %p209, %p210
      %p212 = scmp.ne.s32.totalorder %s201, %s202
      %p213 = scmp.eq.s32.totalorder %s27, 0
      %p214 = por %p212, %p213
      %p215 = scmp.ne.s32.totalorder %s201, %s202
      %p216 = scmp.eq.s32.totalorder %s28, 1
      %p217 = por %p215, %p216
      %p219 = scmp.ne.s32.totalorder %s202, %s218
      %p220 = scmp.eq.s32.totalorder %s28, 0
      %p221 = por %p219, %p220
      %p222 = scmp.le.s32.totalorder 1, %s22
      %p223 = scmp.lt.s32.totalorder %s22, 3
      %p224 = pnand %p222, %p223
      %p225 = pneg %p224
      // Predicated region
      $region9: #{bottleneck_forward.1} parent=5 // pred_check
        _
      $region10: #{bottleneck_forward.1} parent=5 // pred_check_branch
        %227 = sbr.rel (%p224) target = $region12
      $region11: #{bottleneck_forward.1} parent=5 // pred_region
        %s228 = ssub.s32 %s22, 1
        // Predicated region
        $region13: #{bottleneck_forward.1} parent=11 // pred_check
          %p229 = pneg %p81
        $region14: #{bottleneck_forward.1} parent=11 // pred_check_branch
          %231 = sbr.rel (%p229) target = $region16
        $region15: #{bottleneck_forward.1} parent=11 // pred_region
          %s233 = ssub.s32 1024, 1024
          %234 = vsyncadd [#allocation6], %s233
          %s235 = sshll.u32 [#allocation5], 4
          %s236 = int_to_ptr.vmem [resolvable:$true] %s235
          %241 = dma.hbm_to_vmem [thread:$0]  %s1, 1024, %s236, [#allocation6], 64, 64, 4
        $region16: #{bottleneck_forward.1} parent=11 // pred_fallthru
          _
        // Predicated region
        $region17: #{bottleneck_forward.1} parent=11 // pred_check
          %p242 = pneg %p102
        $region18: #{bottleneck_forward.1} parent=11 // pred_check_branch
          %244 = sbr.rel (%p242) target = $region20
        $region19: #{bottleneck_forward.1} parent=11 // pred_region
          %s246 = ssub.s32 16, 16
          %247 = vsyncadd [#allocation6], %s246
          %s249 = sshll.u32 [#allocation7], 4
          %s250 = int_to_ptr.vmem [resolvable:$true] %s249
          %252 = dma.hbm_to_vmem [thread:$0]  %s2, 16, %s250, [#allocation6]
        $region20: #{bottleneck_forward.1} parent=11 // pred_fallthru
          _
        // Predicated region
        $region21: #{bottleneck_forward.1} parent=11 // pred_check
          %p253 = pneg %p123
        $region22: #{bottleneck_forward.1} parent=11 // pred_check_branch
          %255 = sbr.rel (%p253) target = $region24
        $region23: #{bottleneck_forward.1} parent=11 // pred_region
          %s257 = ssub.s32 256, 256
          %258 = vsyncadd [#allocation9], %s257
          %s259 = sshll.u32 [#allocation8], 4
          %s260 = int_to_ptr.vmem [resolvable:$true] %s259
          %265 = dma.hbm_to_vmem [thread:$0]  %s3, 256, %s260, [#allocation9], 128, 128, 8
        $region24: #{bottleneck_forward.1} parent=11 // pred_fallthru
          _
        // Predicated region
        $region25: #{bottleneck_forward.1} parent=11 // pred_check
          %p266 = pneg %p144
        $region26: #{bottleneck_forward.1} parent=11 // pred_check_branch
          %268 = sbr.rel (%p266) target = $region28
        $region27: #{bottleneck_forward.1} parent=11 // pred_region
          %s270 = ssub.s32 16, 16
          %271 = vsyncadd [#allocation9], %s270
          %s273 = sshll.u32 [#allocation10], 4
          %s274 = int_to_ptr.vmem [resolvable:$true] %s273
          %276 = dma.hbm_to_vmem [thread:$0]  %s4, 16, %s274, [#allocation9]
        $region28: #{bottleneck_forward.1} parent=11 // pred_fallthru
          _
        // Predicated region
        $region29: #{bottleneck_forward.1} parent=11 // pred_check
          %p277 = pneg %p165
        $region30: #{bottleneck_forward.1} parent=11 // pred_check_branch
          %279 = sbr.rel (%p277) target = $region32
        $region31: #{bottleneck_forward.1} parent=11 // pred_region
          %s281 = ssub.s32 1024, 1024
          %282 = vsyncadd [#allocation12], %s281
          %s283 = sshll.u32 [#allocation11], 4
          %s284 = int_to_ptr.vmem [resolvable:$true] %s283
          %289 = dma.hbm_to_vmem [thread:$0]  %s5, 1024, %s284, [#allocation12], 64, 64, 4
        $region32: #{bottleneck_forward.1} parent=11 // pred_fallthru
          _
        // Predicated region
        $region33: #{bottleneck_forward.1} parent=11 // pred_check
          %p290 = pneg %p186
        $region34: #{bottleneck_forward.1} parent=11 // pred_check_branch
          %292 = sbr.rel (%p290) target = $region36
        $region35: #{bottleneck_forward.1} parent=11 // pred_region
          %s294 = ssub.s32 16, 16
          %295 = vsyncadd [#allocation12], %s294
          %s297 = sshll.u32 [#allocation13], 4
          %s298 = int_to_ptr.vmem [resolvable:$true] %s297
          %300 = dma.hbm_to_vmem [thread:$0]  %s6, 16, %s298, [#allocation12]
        $region36: #{bottleneck_forward.1} parent=11 // pred_fallthru
          _
      $region12: #{bottleneck_forward.1} parent=5 // pred_fallthru
        _
      %p301 = scmp.lt.s32.totalorder %s22, 2
      // Predicated region
      $region37: #{bottleneck_forward.1} parent=5 // pred_check
        %p302 = pneg %p301
      $region38: #{bottleneck_forward.1} parent=5 // pred_check_branch
        %304 = sbr.rel (%p302) target = $region40
      $region39: #{bottleneck_forward.1} parent=5 // pred_region
        // Predicated region
        $region41: #{bottleneck_forward.1} parent=39 // pred_check
          %p305 = pneg %p54
        $region42: #{bottleneck_forward.1} parent=39 // pred_check_branch
          %307 = sbr.rel (%p305) target = $region44
        $region43: #{bottleneck_forward.1} parent=39 // pred_region
          %s308 = sand.u32 %s44, 1
          %s309 = scalar_lea.sflag [#allocation3], %s308
          %s310 = sand.u32 %s44, 1
          %s311 = smul.addr %s310, 432
          %s312 = scalar_lea.vmem [#allocation2], %s311
          %s314 = ssub.s32 6912, 6912
          %315 = vsyncadd %s309, %s314
          %s316 = smul.addr %s29, 54
          %s317 = smul.addr %s316, 128
          %s318 = scalar_lea.hbm %s0, %s317
          %s319 = sshll.u32 %s312, 4
          %s320 = int_to_ptr.vmem [resolvable:$true] %s319
          %325 = dma.hbm_to_vmem [thread:$0]  %s318, 6912, %s320, %s309, 128, 128, 8
        $region44: #{bottleneck_forward.1} parent=39 // pred_fallthru
          _
      $region40: #{bottleneck_forward.1} parent=5 // pred_fallthru
        _
      %p326 = scmp.le.s32.totalorder 1, %s22
      %p327 = scmp.lt.s32.totalorder %s22, 3
      %p328 = pnand %p326, %p327
      %p329 = pneg %p328
      // Predicated region
      $region45: #{bottleneck_forward.1} parent=5 // pred_check
        _
      $region46: #{bottleneck_forward.1} parent=5 // pred_check_branch
        %331 = sbr.rel (%p328) target = $region48
      $region47: #{bottleneck_forward.1} parent=5 // pred_region
        %s332 = ssub.s32 %s22, 1
        %s333 = sand.u32 %s47, 1
        %s334 = scalar_lea.sflag [#allocation3], %s333
        %s335 = sand.u32 %s47, 1
        %s336 = smul.addr %s335, 432
        %s337 = scalar_lea.vmem [#allocation2], %s336
        // Predicated region
        $region49: #{bottleneck_forward.1} parent=47 // pred_check
          %p338 = pneg %p60
        $region50: #{bottleneck_forward.1} parent=47 // pred_check_branch
          %340 = sbr.rel (%p338) target = $region52
        $region51: #{bottleneck_forward.1} parent=47 // pred_region
          %341 = dma.done %s334, 6912
        $region52: #{bottleneck_forward.1} parent=47 // pred_fallthru
          _
        // Predicated region
        $region53: #{bottleneck_forward.1} parent=47 // pred_check
          %p342 = pneg %p81
        $region54: #{bottleneck_forward.1} parent=47 // pred_check_branch
          %344 = sbr.rel (%p342) target = $region56
        $region55: #{bottleneck_forward.1} parent=47 // pred_region
          %345 = dma.done [#allocation6], 1024
        $region56: #{bottleneck_forward.1} parent=47 // pred_fallthru
          _
        // Predicated region
        $region57: #{bottleneck_forward.1} parent=47 // pred_check
          %p346 = pneg %p102
        $region58: #{bottleneck_forward.1} parent=47 // pred_check_branch
          %348 = sbr.rel (%p346) target = $region60
        $region59: #{bottleneck_forward.1} parent=47 // pred_region
          %349 = dma.done [#allocation6], 16
        $region60: #{bottleneck_forward.1} parent=47 // pred_fallthru
          _
        // Predicated region
        $region61: #{bottleneck_forward.1} parent=47 // pred_check
          %p350 = pneg %p123
        $region62: #{bottleneck_forward.1} parent=47 // pred_check_branch
          %352 = sbr.rel (%p350) target = $region64
        $region63: #{bottleneck_forward.1} parent=47 // pred_region
          %353 = dma.done [#allocation9], 256
        $region64: #{bottleneck_forward.1} parent=47 // pred_fallthru
          _
        // Predicated region
        $region65: #{bottleneck_forward.1} parent=47 // pred_check
          %p354 = pneg %p144
        $region66: #{bottleneck_forward.1} parent=47 // pred_check_branch
          %356 = sbr.rel (%p354) target = $region68
        $region67: #{bottleneck_forward.1} parent=47 // pred_region
          %357 = dma.done [#allocation9], 16
        $region68: #{bottleneck_forward.1} parent=47 // pred_fallthru
          _
        // Predicated region
        $region69: #{bottleneck_forward.1} parent=47 // pred_check
          %p358 = pneg %p165
        $region70: #{bottleneck_forward.1} parent=47 // pred_check_branch
          %360 = sbr.rel (%p358) target = $region72
        $region71: #{bottleneck_forward.1} parent=47 // pred_region
          %361 = dma.done [#allocation12], 1024
        $region72: #{bottleneck_forward.1} parent=47 // pred_fallthru
          _
        // Predicated region
        $region73: #{bottleneck_forward.1} parent=47 // pred_check
          %p362 = pneg %p186
        $region74: #{bottleneck_forward.1} parent=47 // pred_check_branch
          %364 = sbr.rel (%p362) target = $region76
        $region75: #{bottleneck_forward.1} parent=47 // pred_region
          %365 = dma.done [#allocation12], 16
        $region76: #{bottleneck_forward.1} parent=47 // pred_fallthru
          _
        %s366 = sand.u32 %s47, 1
        %s367 = scalar_lea.sflag [#allocation3], %s366
        %s368 = sand.u32 %s47, 1
        %s369 = smul.addr %s368, 432
        %s370 = scalar_lea.vmem [#allocation2], %s369
        %p371 = pneg %p60
        %p372 = pneg %p57
        %p373 = pneg %p81
        %p374 = pneg %p78
        %p375 = pneg %p102
        %p376 = pneg %p99
        %p377 = pneg %p123
        %p378 = pneg %p120
        %p379 = pneg %p144
        %p380 = pneg %p141
        %p381 = pneg %p165
        %p382 = pneg %p162
        %p383 = pneg %p186
        %p384 = pneg %p183
        %p385 = pneg %p214
        %p386 = pneg %p211
        %s387 = sand.u32 %s201, 1
        %s388 = scalar_lea.sflag [#allocation4], %s387
        %s389 = sand.u32 %s201, 1
        %s390 = smul.addr %s389, 256
        %s391 = scalar_lea.vmem [#allocation14], %s390
        %s392 = smul.u32 16, %s32
        %s394 = smul.u32 %s32, 16
        %s395 = smul.u32 %s394, 24
        %s396 = scalar_lea.vmem %s337, %s395 [#allocation2]
        %v397 = vld [vmem:[%s396] sm:$0xff]
        %v398 = vld [vmem:[%s396 + $0x8] sm:$0xff]
        %v399 = vld [vmem:[%s396 + $0x10] sm:$0xff]
        %v400 = vld [vmem:[%s396 + $0x18] sm:$0xff]
        %v401 = vld [vmem:[%s396 + $0x20] sm:$0xff]
        %v402 = vld [vmem:[%s396 + $0x28] sm:$0xff]
        %v403 = vld [vmem:[%s396 + $0x30] sm:$0xff]
        %v404 = vld [vmem:[%s396 + $0x38] sm:$0xff]
        %v405 = vld [vmem:[%s396 + $0x40] sm:$0xff]
        %v406 = vld [vmem:[%s396 + $0x48] sm:$0xff]
        %v407 = vld [vmem:[%s396 + $0x50] sm:$0xff]
        %v408 = vld [vmem:[%s396 + $0x58] sm:$0xff]
        %v409 = vld [vmem:[%s396 + $0x60] sm:$0xff]
        %v410 = vld [vmem:[%s396 + $0x68] sm:$0xff]
        %v411 = vld [vmem:[%s396 + $0x70] sm:$0xff]
        %v412 = vld [vmem:[%s396 + $0x78] sm:$0xff]
        %v413 = vld [vmem:[%s396 + $0x80] sm:$0xff]
        %v414 = vld [vmem:[%s396 + $0x88] sm:$0xff]
        %v415 = vld [vmem:[%s396 + $0x90] sm:$0xff]
        %v416 = vld [vmem:[%s396 + $0x98] sm:$0xff]
        %v417 = vld [vmem:[%s396 + $0xa0] sm:$0xff]
        %v418 = vld [vmem:[%s396 + $0xa8] sm:$0xff]
        %v419 = vld [vmem:[%s396 + $0xb0] sm:$0xff]
        %v420 = vld [vmem:[%s396 + $0xb8] sm:$0xff]
        %v421 = vld [vmem:[%s396 + $0xc0] sm:$0xff]
        %v422 = vld [vmem:[%s396 + $0xc8] sm:$0xff]
        %v423 = vld [vmem:[%s396 + $0xd0] sm:$0xff]
        %v424 = vld [vmem:[%s396 + $0xd8] sm:$0xff]
        %v425 = vld [vmem:[%s396 + $0xe0] sm:$0xff]
        %v426 = vld [vmem:[%s396 + $0xe8] sm:$0xff]
        %v427 = vld [vmem:[%s396 + $0xf0] sm:$0xff]
        %v428 = vld [vmem:[%s396 + $0xf8] sm:$0xff]
        %v429 = vld [vmem:[%s396 + $0x100] sm:$0xff]
        %v430 = vld [vmem:[%s396 + $0x108] sm:$0xff]
        %v431 = vld [vmem:[%s396 + $0x110] sm:$0xff]
        %v432 = vld [vmem:[%s396 + $0x118] sm:$0xff]
        %v433 = vld [vmem:[%s396 + $0x120] sm:$0xff]
        %v434 = vld [vmem:[%s396 + $0x128] sm:$0xff]
        %v435 = vld [vmem:[%s396 + $0x130] sm:$0xff]
        %v436 = vld [vmem:[%s396 + $0x138] sm:$0xff]
        %v437 = vld [vmem:[%s396 + $0x140] sm:$0xff]
        %v438 = vld [vmem:[%s396 + $0x148] sm:$0xff]
        %v439 = vld [vmem:[%s396 + $0x150] sm:$0xff]
        %v440 = vld [vmem:[%s396 + $0x158] sm:$0xff]
        %v441 = vld [vmem:[%s396 + $0x160] sm:$0xff]
        %v442 = vld [vmem:[%s396 + $0x168] sm:$0xff]
        %v443 = vld [vmem:[%s396 + $0x170] sm:$0xff]
        %v444 = vld [vmem:[%s396 + $0x178] sm:$0xff]
        %v445 = vld [vmem:[%s396 + $0x180] sm:$0xff]
        %v446 = vld [vmem:[%s396 + $0x188] sm:$0xff]
        %v447 = vld [vmem:[%s396 + $0x190] sm:$0xff]
        %v448 = vld [vmem:[%s396 + $0x198] sm:$0xff]
        %v449 = vld [vmem:[%s396 + $0x1a0] sm:$0xff]
        %v450 = vld [vmem:[%s396 + $0x1a8] sm:$0xff]
        %v451 = vpack.c.bf16 %v398, %v397
        %v452 = vpack.c.bf16 %v400, %v399
        %v453 = vpack.c.bf16 %v402, %v401
        %v454 = vpack.c.bf16 %v404, %v403
        %v455 = vpack.c.bf16 %v406, %v405
        %v456 = vpack.c.bf16 %v408, %v407
        %v457 = vpack.c.bf16 %v410, %v409
        %v458 = vpack.c.bf16 %v412, %v411
        %v459 = vpack.c.bf16 %v414, %v413
        %v460 = vpack.c.bf16 %v416, %v415
        %v461 = vpack.c.bf16 %v418, %v417
        %v462 = vpack.c.bf16 %v420, %v419
        %v463 = vpack.c.bf16 %v422, %v421
        %v464 = vpack.c.bf16 %v424, %v423
        %v465 = vpack.c.bf16 %v426, %v425
        %v466 = vpack.c.bf16 %v428, %v427
        %v467 = vpack.c.bf16 %v430, %v429
        %v468 = vpack.c.bf16 %v432, %v431
        %v469 = vpack.c.bf16 %v434, %v433
        %v470 = vpack.c.bf16 %v436, %v435
        %v471 = vpack.c.bf16 %v438, %v437
        %v472 = vpack.c.bf16 %v440, %v439
        %v473 = vpack.c.bf16 %v442, %v441
        %v474 = vpack.c.bf16 %v444, %v443
        %v475 = vpack.c.bf16 %v446, %v445
        %v476 = vpack.c.bf16 %v448, %v447
        %v477 = vpack.c.bf16 %v450, %v449
        %v478 = vld [vmem:[#allocation5] sm:$0xf]
        %v479 = vld [vmem:[#allocation5 + $0x4] sm:$0xf]
        %v480 = vld [vmem:[#allocation5 + $0x8] sm:$0xf]
        %v481 = vld [vmem:[#allocation5 + $0xc] sm:$0xf]
        %v482 = vld [vmem:[#allocation5 + $0x10] sm:$0xf]
        %v483 = vld [vmem:[#allocation5 + $0x14] sm:$0xf]
        %v484 = vld [vmem:[#allocation5 + $0x18] sm:$0xf]
        %v485 = vld [vmem:[#allocation5 + $0x1c] sm:$0xf]
        %v486 = vld [vmem:[#allocation5 + $0x20] sm:$0xf]
        %v487 = vld [vmem:[#allocation5 + $0x24] sm:$0xf]
        %v488 = vld [vmem:[#allocation5 + $0x28] sm:$0xf]
        %v489 = vld [vmem:[#allocation5 + $0x2c] sm:$0xf]
        %v490 = vld [vmem:[#allocation5 + $0x30] sm:$0xf]
        %v491 = vld [vmem:[#allocation5 + $0x34] sm:$0xf]
        %v492 = vld [vmem:[#allocation5 + $0x38] sm:$0xf]
        %v493 = vld [vmem:[#allocation5 + $0x3c] sm:$0xf]
        %v494 = vld [vmem:[#allocation7] sm:$0x1]
        %v496 = vlaneseq
        %v497 = vshrl.u32 %v496, 7
        %v498 = vsub.s32 0, %v497
        %v499 = vrot.slane %v494, %v498
        %v517 = vunpack.c.l.b16 %v478
        %v518 = vunpack.c.l.b16 %v479
        %v519 = vunpack.c.l.b16 %v480
        %v520 = vunpack.c.l.b16 %v481
        %v521 = vunpack.c.l.b16 %v482
        %v522 = vunpack.c.l.b16 %v483
        %v523 = vunpack.c.l.b16 %v484
        %v524 = vunpack.c.l.b16 %v485
        %v525 = vunpack.c.l.b16 %v486
        %v526 = vunpack.c.l.b16 %v487
        %v527 = vunpack.c.l.b16 %v488
        %v528 = vunpack.c.l.b16 %v489
        %v529 = vunpack.c.l.b16 %v490
        %v530 = vunpack.c.l.b16 %v491
        %v531 = vunpack.c.l.b16 %v492
        %v532 = vunpack.c.l.b16 %v493
        %v533 = vpack.c.b16 %v518, %v517
        %v534 = vpack.c.b16 %v520, %v519
        %v535 = vpack.c.b16 %v522, %v521
        %v536 = vpack.c.b16 %v524, %v523
        %v537 = vpack.c.b16 %v526, %v525
        %v538 = vpack.c.b16 %v528, %v527
        %v539 = vpack.c.b16 %v530, %v529
        %v540 = vpack.c.b16 %v532, %v531
        %549 = vmatprep.subr.bf16.mxu0 0
        %550 = vmatpush1.bf16.msra.mxu0 %v533
        %551 = vmatprep.subr.bf16.mxu0 0
        %552 = vmatpush1.bf16.msra.mxu0 %v534
        %553 = vmatprep.subr.bf16.mxu0 0
        %554 = vmatpush1.bf16.msra.mxu0 %v535
        %555 = vmatprep.subr.bf16.mxu0 0
        %556 = vmatpush1.bf16.msra.mxu0 %v536
        %557 = vmatprep.subr.bf16.mxu0 0
        %558 = vmatpush1.bf16.msra.mxu0 %v537
        %559 = vmatprep.subr.bf16.mxu0 0
        %560 = vmatpush1.bf16.msra.mxu0 %v538
        %561 = vmatprep.subr.bf16.mxu0 0
        %562 = vmatpush1.bf16.msra.mxu0 %v539
        %563 = vmatprep.subr.bf16.mxu0 0
        %564 = vmatpush1.bf16.msra.mxu0 %v540
        %565 = vmatprep.subr.bf16.mxu0 0
        %566 = vmatpush1.bf16.msra.mxu0 0
        %567 = vmatprep.subr.bf16.mxu0 0
        %568 = vmatpush1.bf16.msra.mxu0 0
        %569 = vmatprep.subr.bf16.mxu0 0
        %570 = vmatpush1.bf16.msra.mxu0 0
        %571 = vmatprep.subr.bf16.mxu0 0
        %572 = vmatpush1.bf16.msra.mxu0 0
        %573 = vmatprep.subr.bf16.mxu0 0
        %574 = vmatpush1.bf16.msra.mxu0 0
        %575 = vmatprep.subr.bf16.mxu0 0
        %576 = vmatpush1.bf16.msra.mxu0 0
        %577 = vmatprep.subr.bf16.mxu0 0
        %578 = vmatpush1.bf16.msra.mxu0 0
        %579 = vmatprep.subr.bf16.mxu0 0
        %580 = vmatpush1.bf16.msra.mxu0 0
        %581 = vmatprep.mubr.bf16.mxu0 0
        %582 = vmatmul.mubr.bf16.gmra.mrb[0].mxu0 %v451
        %v583 = vpop.f32.mrb[0].mxu0
        %v584 = vadd.f32 %v499, %v583
        %v585 = vpop.f32.mrb[0].mxu0
        %v586 = vpop.f32.mrb[0].mxu0
        %v587 = vadd.f32 %v499, %v586
        %v588 = vpop.f32.mrb[0].mxu0
        %589 = vmatprep.mubr.bf16.mxu0 0
        %590 = vmatmul.mubr.bf16.gmra.mrb[0].mxu0 %v452
        %v591 = vpop.f32.mrb[0].mxu0
        %v592 = vadd.f32 %v499, %v591
        %v593 = vpop.f32.mrb[0].mxu0
        %v594 = vpop.f32.mrb[0].mxu0
        %v595 = vadd.f32 %v499, %v594
        %v596 = vpop.f32.mrb[0].mxu0
        %597 = vmatprep.mubr.bf16.mxu0 0
        %598 = vmatmul.mubr.bf16.gmra.mrb[0].mxu0 %v453
        %v599 = vpop.f32.mrb[0].mxu0
        %v600 = vadd.f32 %v499, %v599
        %v601 = vpop.f32.mrb[0].mxu0
        %v602 = vpop.f32.mrb[0].mxu0
        %v603 = vadd.f32 %v499, %v602
        %v604 = vpop.f32.mrb[0].mxu0
        %605 = vmatprep.mubr.bf16.mxu0 0
        %606 = vmatmul.mubr.bf16.gmra.mrb[0].mxu0 %v454
        %v607 = vpop.f32.mrb[0].mxu0
        %v608 = vadd.f32 %v499, %v607
        %v609 = vpop.f32.mrb[0].mxu0
        %v610 = vpop.f32.mrb[0].mxu0
        %v611 = vadd.f32 %v499, %v610
        %v612 = vpop.f32.mrb[0].mxu0
        %613 = vmatprep.mubr.bf16.mxu0 0
        %614 = vmatmul.mubr.bf16.gmra.mrb[0].mxu0 %v455
        %v615 = vpop.f32.mrb[0].mxu0
        %v616 = vadd.f32 %v499, %v615
        %v617 = vpop.f32.mrb[0].mxu0
        %v618 = vpop.f32.mrb[0].mxu0
        %v619 = vadd.f32 %v499, %v618
        %v620 = vpop.f32.mrb[0].mxu0
        %621 = vmatprep.mubr.bf16.mxu0 0
        %622 = vmatmul.mubr.bf16.gmra.mrb[0].mxu0 %v456
        %v623 = vpop.f32.mrb[0].mxu0
        %v624 = vadd.f32 %v499, %v623
        %v625 = vpop.f32.mrb[0].mxu0
        %v626 = vpop.f32.mrb[0].mxu0
        %v627 = vadd.f32 %v499, %v626
        %v628 = vpop.f32.mrb[0].mxu0
        %629 = vmatprep.mubr.bf16.mxu0 0
        %630 = vmatmul.mubr.bf16.gmra.mrb[0].mxu0 %v457
        %v631 = vpop.f32.mrb[0].mxu0
        %v632 = vadd.f32 %v499, %v631
        %v633 = vpop.f32.mrb[0].mxu0
        %v634 = vpop.f32.mrb[0].mxu0
        %v635 = vadd.f32 %v499, %v634
        %v636 = vpop.f32.mrb[0].mxu0
        %637 = vmatprep.mubr.bf16.mxu0 0
        %638 = vmatmul.mubr.bf16.gmra.mrb[0].mxu0 %v458
        %v639 = vpop.f32.mrb[0].mxu0
        %v640 = vadd.f32 %v499, %v639
        %v641 = vpop.f32.mrb[0].mxu0
        %v642 = vpop.f32.mrb[0].mxu0
        %v643 = vadd.f32 %v499, %v642
        %v644 = vpop.f32.mrb[0].mxu0
        %645 = vmatprep.mubr.bf16.mxu0 0
        %646 = vmatmul.mubr.bf16.gmra.mrb[0].mxu0 %v459
        %v647 = vpop.f32.mrb[0].mxu0
        %v648 = vadd.f32 %v499, %v647
        %v649 = vpop.f32.mrb[0].mxu0
        %v650 = vpop.f32.mrb[0].mxu0
        %v651 = vadd.f32 %v499, %v650
        %v652 = vpop.f32.mrb[0].mxu0
        %653 = vmatprep.mubr.bf16.mxu0 0
        %654 = vmatmul.mubr.bf16.gmra.mrb[0].mxu0 %v460
        %v655 = vpop.f32.mrb[0].mxu0
        %v656 = vadd.f32 %v499, %v655
        %v657 = vpop.f32.mrb[0].mxu0
        %v658 = vpop.f32.mrb[0].mxu0
        %v659 = vadd.f32 %v499, %v658
        %v660 = vpop.f32.mrb[0].mxu0
        %661 = vmatprep.mubr.bf16.mxu0 0
        %662 = vmatmul.mubr.bf16.gmra.mrb[0].mxu0 %v461
        %v663 = vpop.f32.mrb[0].mxu0
        %v664 = vadd.f32 %v499, %v663
        %v665 = vpop.f32.mrb[0].mxu0
        %v666 = vpop.f32.mrb[0].mxu0
        %v667 = vadd.f32 %v499, %v666
        %v668 = vpop.f32.mrb[0].mxu0
        %669 = vmatprep.mubr.bf16.mxu0 0
        %670 = vmatmul.mubr.bf16.gmra.mrb[0].mxu0 %v462
        %v671 = vpop.f32.mrb[0].mxu0
        %v672 = vadd.f32 %v499, %v671
        %v673 = vpop.f32.mrb[0].mxu0
        %v674 = vpop.f32.mrb[0].mxu0
        %v675 = vadd.f32 %v499, %v674
        %v676 = vpop.f32.mrb[0].mxu0
        %677 = vmatprep.mubr.bf16.mxu0 0
        %678 = vmatmul.mubr.bf16.gmra.mrb[0].mxu0 %v463
        %v679 = vpop.f32.mrb[0].mxu0
        %v680 = vadd.f32 %v499, %v679
        %v681 = vpop.f32.mrb[0].mxu0
        %v682 = vpop.f32.mrb[0].mxu0
        %v683 = vadd.f32 %v499, %v682
        %v684 = vpop.f32.mrb[0].mxu0
        %685 = vmatprep.mubr.bf16.mxu0 0
        %686 = vmatmul.mubr.bf16.gmra.mrb[0].mxu0 %v464
        %v687 = vpop.f32.mrb[0].mxu0
        %v688 = vadd.f32 %v499, %v687
        %v689 = vpop.f32.mrb[0].mxu0
        %v690 = vpop.f32.mrb[0].mxu0
        %v691 = vadd.f32 %v499, %v690
        %v692 = vpop.f32.mrb[0].mxu0
        %693 = vmatprep.mubr.bf16.mxu0 0
        %694 = vmatmul.mubr.bf16.gmra.mrb[0].mxu0 %v465
        %v695 = vpop.f32.mrb[0].mxu0
        %v696 = vadd.f32 %v499, %v695
        %v697 = vpop.f32.mrb[0].mxu0
        %v698 = vpop.f32.mrb[0].mxu0
        %v699 = vadd.f32 %v499, %v698
        %v700 = vpop.f32.mrb[0].mxu0
        %701 = vmatprep.mubr.bf16.mxu0 0
        %702 = vmatmul.mubr.bf16.gmra.mrb[0].mxu0 %v466
        %v703 = vpop.f32.mrb[0].mxu0
        %v704 = vadd.f32 %v499, %v703
        %v705 = vpop.f32.mrb[0].mxu0
        %v706 = vpop.f32.mrb[0].mxu0
        %v707 = vadd.f32 %v499, %v706
        %v708 = vpop.f32.mrb[0].mxu0
        %709 = vmatprep.mubr.bf16.mxu0 0
        %710 = vmatmul.mubr.bf16.gmra.mrb[0].mxu0 %v467
        %v711 = vpop.f32.mrb[0].mxu0
        %v712 = vadd.f32 %v499, %v711
        %v713 = vpop.f32.mrb[0].mxu0
        %v714 = vpop.f32.mrb[0].mxu0
        %v715 = vadd.f32 %v499, %v714
        %v716 = vpop.f32.mrb[0].mxu0
        %717 = vmatprep.mubr.bf16.mxu0 0
        %718 = vmatmul.mubr.bf16.gmra.mrb[0].mxu0 %v468
        %v719 = vpop.f32.mrb[0].mxu0
        %v720 = vadd.f32 %v499, %v719
        %v721 = vpop.f32.mrb[0].mxu0
        %v722 = vpop.f32.mrb[0].mxu0
        %v723 = vadd.f32 %v499, %v722
        %v724 = vpop.f32.mrb[0].mxu0
        %725 = vmatprep.mubr.bf16.mxu0 0
        %726 = vmatmul.mubr.bf16.gmra.mrb[0].mxu0 %v469
        %v727 = vpop.f32.mrb[0].mxu0
        %v728 = vadd.f32 %v499, %v727
        %v729 = vpop.f32.mrb[0].mxu0
        %v730 = vpop.f32.mrb[0].mxu0
        %v731 = vadd.f32 %v499, %v730
        %v732 = vpop.f32.mrb[0].mxu0
        %733 = vmatprep.mubr.bf16.mxu0 0
        %734 = vmatmul.mubr.bf16.gmra.mrb[0].mxu0 %v470
        %v735 = vpop.f32.mrb[0].mxu0
        %v736 = vadd.f32 %v499, %v735
        %v737 = vpop.f32.mrb[0].mxu0
        %v738 = vpop.f32.mrb[0].mxu0
        %v739 = vadd.f32 %v499, %v738
        %v740 = vpop.f32.mrb[0].mxu0
        %741 = vmatprep.mubr.bf16.mxu0 0
        %742 = vmatmul.mubr.bf16.gmra.mrb[0].mxu0 %v471
        %v743 = vpop.f32.mrb[0].mxu0
        %v744 = vadd.f32 %v499, %v743
        %v745 = vpop.f32.mrb[0].mxu0
        %v746 = vpop.f32.mrb[0].mxu0
        %v747 = vadd.f32 %v499, %v746
        %v748 = vpop.f32.mrb[0].mxu0
        %749 = vmatprep.mubr.bf16.mxu0 0
        %750 = vmatmul.mubr.bf16.gmra.mrb[0].mxu0 %v472
        %v751 = vpop.f32.mrb[0].mxu0
        %v752 = vadd.f32 %v499, %v751
        %v753 = vpop.f32.mrb[0].mxu0
        %v754 = vpop.f32.mrb[0].mxu0
        %v755 = vadd.f32 %v499, %v754
        %v756 = vpop.f32.mrb[0].mxu0
        %757 = vmatprep.mubr.bf16.mxu0 0
        %758 = vmatmul.mubr.bf16.gmra.mrb[0].mxu0 %v473
        %v759 = vpop.f32.mrb[0].mxu0
        %v760 = vadd.f32 %v499, %v759
        %v761 = vpop.f32.mrb[0].mxu0
        %v762 = vpop.f32.mrb[0].mxu0
        %v763 = vadd.f32 %v499, %v762
        %v764 = vpop.f32.mrb[0].mxu0
        %765 = vmatprep.mubr.bf16.mxu0 0
        %766 = vmatmul.mubr.bf16.gmra.mrb[0].mxu0 %v474
        %v767 = vpop.f32.mrb[0].mxu0
        %v768 = vadd.f32 %v499, %v767
        %v769 = vpop.f32.mrb[0].mxu0
        %v770 = vpop.f32.mrb[0].mxu0
        %v771 = vadd.f32 %v499, %v770
        %v772 = vpop.f32.mrb[0].mxu0
        %773 = vmatprep.mubr.bf16.mxu0 0
        %774 = vmatmul.mubr.bf16.gmra.mrb[0].mxu0 %v475
        %v775 = vpop.f32.mrb[0].mxu0
        %v776 = vadd.f32 %v499, %v775
        %v777 = vpop.f32.mrb[0].mxu0
        %v778 = vpop.f32.mrb[0].mxu0
        %v779 = vadd.f32 %v499, %v778
        %v780 = vpop.f32.mrb[0].mxu0
        %781 = vmatprep.mubr.bf16.mxu0 0
        %782 = vmatmul.mubr.bf16.gmra.mrb[0].mxu0 %v476
        %v783 = vpop.f32.mrb[0].mxu0
        %v784 = vadd.f32 %v499, %v783
        %v785 = vpop.f32.mrb[0].mxu0
        %v786 = vpop.f32.mrb[0].mxu0
        %v787 = vadd.f32 %v499, %v786
        %v788 = vpop.f32.mrb[0].mxu0
        %789 = vmatprep.mubr.bf16.mxu0 0
        %790 = vmatmul.mubr.bf16.gmra.mrb[0].mxu0 %v477
        %v791 = vpop.f32.mrb[0].mxu0
        %v792 = vadd.f32 %v499, %v791
        %v793 = vpop.f32.mrb[0].mxu0
        %v794 = vpop.f32.mrb[0].mxu0
        %v795 = vadd.f32 %v499, %v794
        %v796 = vpop.f32.mrb[0].mxu0
        %797 = vdwg.mxu0
        %v798 = vmax.f32 %v584, 0.0
        %v799 = vmax.f32 %v587, 0.0
        %v800 = vmax.f32 %v592, 0.0
        %v801 = vmax.f32 %v595, 0.0
        %v802 = vmax.f32 %v600, 0.0
        %v803 = vmax.f32 %v603, 0.0
        %v804 = vmax.f32 %v608, 0.0
        %v805 = vmax.f32 %v611, 0.0
        %v806 = vmax.f32 %v616, 0.0
        %v807 = vmax.f32 %v619, 0.0
        %v808 = vmax.f32 %v624, 0.0
        %v809 = vmax.f32 %v627, 0.0
        %v810 = vmax.f32 %v632, 0.0
        %v811 = vmax.f32 %v635, 0.0
        %v812 = vmax.f32 %v640, 0.0
        %v813 = vmax.f32 %v643, 0.0
        %v814 = vmax.f32 %v648, 0.0
        %v815 = vmax.f32 %v651, 0.0
        %v816 = vmax.f32 %v656, 0.0
        %v817 = vmax.f32 %v659, 0.0
        %v818 = vmax.f32 %v664, 0.0
        %v819 = vmax.f32 %v667, 0.0
        %v820 = vmax.f32 %v672, 0.0
        %v821 = vmax.f32 %v675, 0.0
        %v822 = vmax.f32 %v680, 0.0
        %v823 = vmax.f32 %v683, 0.0
        %v824 = vmax.f32 %v688, 0.0
        %v825 = vmax.f32 %v691, 0.0
        %v826 = vmax.f32 %v696, 0.0
        %v827 = vmax.f32 %v699, 0.0
        %v828 = vmax.f32 %v704, 0.0
        %v829 = vmax.f32 %v707, 0.0
        %v830 = vmax.f32 %v712, 0.0
        %v831 = vmax.f32 %v715, 0.0
        %v832 = vmax.f32 %v720, 0.0
        %v833 = vmax.f32 %v723, 0.0
        %v834 = vmax.f32 %v728, 0.0
        %v835 = vmax.f32 %v731, 0.0
        %v836 = vmax.f32 %v736, 0.0
        %v837 = vmax.f32 %v739, 0.0
        %v838 = vmax.f32 %v744, 0.0
        %v839 = vmax.f32 %v747, 0.0
        %v840 = vmax.f32 %v752, 0.0
        %v841 = vmax.f32 %v755, 0.0
        %v842 = vmax.f32 %v760, 0.0
        %v843 = vmax.f32 %v763, 0.0
        %v844 = vmax.f32 %v768, 0.0
        %v845 = vmax.f32 %v771, 0.0
        %v846 = vmax.f32 %v776, 0.0
        %v847 = vmax.f32 %v779, 0.0
        %v848 = vmax.f32 %v784, 0.0
        %v849 = vmax.f32 %v787, 0.0
        %v850 = vmax.f32 %v792, 0.0
        %v851 = vmax.f32 %v795, 0.0
        %v852 = vmin.f32 %v798, 6.0
        %v853 = vmin.f32 %v799, 6.0
        %v854 = vmin.f32 %v800, 6.0
        %v855 = vmin.f32 %v801, 6.0
        %v856 = vmin.f32 %v802, 6.0
        %v857 = vmin.f32 %v803, 6.0
        %v858 = vmin.f32 %v804, 6.0
        %v859 = vmin.f32 %v805, 6.0
        %v860 = vmin.f32 %v806, 6.0
        %v861 = vmin.f32 %v807, 6.0
        %v862 = vmin.f32 %v808, 6.0
        %v863 = vmin.f32 %v809, 6.0
        %v864 = vmin.f32 %v810, 6.0
        %v865 = vmin.f32 %v811, 6.0
        %v866 = vmin.f32 %v812, 6.0
        %v867 = vmin.f32 %v813, 6.0
        %v868 = vmin.f32 %v814, 6.0
        %v869 = vmin.f32 %v815, 6.0
        %v870 = vmin.f32 %v816, 6.0
        %v871 = vmin.f32 %v817, 6.0
        %v872 = vmin.f32 %v818, 6.0
        %v873 = vmin.f32 %v819, 6.0
        %v874 = vmin.f32 %v820, 6.0
        %v875 = vmin.f32 %v821, 6.0
        %v876 = vmin.f32 %v822, 6.0
        %v877 = vmin.f32 %v823, 6.0
        %v878 = vmin.f32 %v824, 6.0
        %v879 = vmin.f32 %v825, 6.0
        %v880 = vmin.f32 %v826, 6.0
        %v881 = vmin.f32 %v827, 6.0
        %v882 = vmin.f32 %v828, 6.0
        %v883 = vmin.f32 %v829, 6.0
        %v884 = vmin.f32 %v830, 6.0
        %v885 = vmin.f32 %v831, 6.0
        %v886 = vmin.f32 %v832, 6.0
        %v887 = vmin.f32 %v833, 6.0
        %v888 = vmin.f32 %v834, 6.0
        %v889 = vmin.f32 %v835, 6.0
        %v890 = vmin.f32 %v836, 6.0
        %v891 = vmin.f32 %v837, 6.0
        %v892 = vmin.f32 %v838, 6.0
        %v893 = vmin.f32 %v839, 6.0
        %v894 = vmin.f32 %v840, 6.0
        %v895 = vmin.f32 %v841, 6.0
        %v896 = vmin.f32 %v842, 6.0
        %v897 = vmin.f32 %v843, 6.0
        %v898 = vmin.f32 %v844, 6.0
        %v899 = vmin.f32 %v845, 6.0
        %v900 = vmin.f32 %v846, 6.0
        %v901 = vmin.f32 %v847, 6.0
        %v902 = vmin.f32 %v848, 6.0
        %v903 = vmin.f32 %v849, 6.0
        %v904 = vmin.f32 %v850, 6.0
        %v905 = vmin.f32 %v851, 6.0
        %v906 = vstv %s394
        %v907 = vadd.s32 %v906, 1
        %v908 = vadd.s32 %v906, 2
        %v909 = vadd.s32 %v906, 3
        %v910 = vadd.s32 %v906, 4
        %v911 = vadd.s32 %v906, 5
        %v912 = vadd.s32 %v906, 6
        %v913 = vadd.s32 %v906, 7
        %v914 = vadd.s32 %v906, 8
        %v915 = vadd.s32 %v906, 9
        %v916 = vadd.s32 %v906, 10
        %v917 = vadd.s32 %v906, 11
        %v918 = vadd.s32 %v906, 12
        %v919 = vadd.s32 %v906, 13
        %v920 = vadd.s32 %v906, 14
        %v921 = vadd.s32 %v906, 15
        %v922 = vadd.s32 %v906, 16
        %v923 = vadd.s32 %v906, 17
        %v924 = vlaneseq
        %v925 = vshrl.u32 %v924, 7
        %v926 = vadd.s32 %v925, 8
        %v927 = vadd.s32 %v925, 16
        %vm928 = vcmp.ge.s32.totalorder %v906, 1
        %vm929 = vcmp.ge.s32.totalorder %v907, 1
        %vm930 = vcmp.ge.s32.totalorder %v908, 1
        %vm931 = vcmp.ge.s32.totalorder %v909, 1
        %vm932 = vcmp.ge.s32.totalorder %v910, 1
        %vm933 = vcmp.ge.s32.totalorder %v911, 1
        %vm934 = vcmp.ge.s32.totalorder %v912, 1
        %vm935 = vcmp.ge.s32.totalorder %v913, 1
        %vm936 = vcmp.ge.s32.totalorder %v914, 1
        %vm937 = vcmp.ge.s32.totalorder %v915, 1
        %vm938 = vcmp.ge.s32.totalorder %v916, 1
        %vm939 = vcmp.ge.s32.totalorder %v917, 1
        %vm940 = vcmp.ge.s32.totalorder %v918, 1
        %vm941 = vcmp.ge.s32.totalorder %v919, 1
        %vm942 = vcmp.ge.s32.totalorder %v920, 1
        %vm943 = vcmp.ge.s32.totalorder %v921, 1
        %vm944 = vcmp.ge.s32.totalorder %v922, 1
        %vm945 = vcmp.ge.s32.totalorder %v923, 1
        %vm946 = vcmp.le.s32.totalorder %v906, 16
        %vm947 = vcmp.le.s32.totalorder %v907, 16
        %vm948 = vcmp.le.s32.totalorder %v908, 16
        %vm949 = vcmp.le.s32.totalorder %v909, 16
        %vm950 = vcmp.le.s32.totalorder %v910, 16
        %vm951 = vcmp.le.s32.totalorder %v911, 16
        %vm952 = vcmp.le.s32.totalorder %v912, 16
        %vm953 = vcmp.le.s32.totalorder %v913, 16
        %vm954 = vcmp.le.s32.totalorder %v914, 16
        %vm955 = vcmp.le.s32.totalorder %v915, 16
        %vm956 = vcmp.le.s32.totalorder %v916, 16
        %vm957 = vcmp.le.s32.totalorder %v917, 16
        %vm958 = vcmp.le.s32.totalorder %v918, 16
        %vm959 = vcmp.le.s32.totalorder %v919, 16
        %vm960 = vcmp.le.s32.totalorder %v920, 16
        %vm961 = vcmp.le.s32.totalorder %v921, 16
        %vm962 = vcmp.le.s32.totalorder %v922, 16
        %vm963 = vcmp.le.s32.totalorder %v923, 16
        %vm964 = vmand %vm928, %vm946
        %vm965 = vmand %vm929, %vm947
        %vm966 = vmand %vm930, %vm948
        %vm967 = vmand %vm931, %vm949
        %vm968 = vmand %vm932, %vm950
        %vm969 = vmand %vm933, %vm951
        %vm970 = vmand %vm934, %vm952
        %vm971 = vmand %vm935, %vm953
        %vm972 = vmand %vm936, %vm954
        %vm973 = vmand %vm937, %vm955
        %vm974 = vmand %vm938, %vm956
        %vm975 = vmand %vm939, %vm957
        %vm976 = vmand %vm940, %vm958
        %vm977 = vmand %vm941, %vm959
        %vm978 = vmand %vm942, %vm960
        %vm979 = vmand %vm943, %vm961
        %vm980 = vmand %vm944, %vm962
        %vm981 = vmand %vm945, %vm963
        %vm982 = vcmp.ge.s32.totalorder %v925, 1
        %vm983 = vcmp.ge.s32.totalorder %v926, 1
        %vm984 = vcmp.ge.s32.totalorder %v927, 1
        %vm985 = vmand %vm964, %vm982
        %vm986 = vmand %vm964, %vm983
        %vm987 = vmand %vm964, %vm984
        %vm988 = vmand %vm965, %vm982
        %vm989 = vmand %vm965, %vm983
        %vm990 = vmand %vm965, %vm984
        %vm991 = vmand %vm966, %vm982
        %vm992 = vmand %vm966, %vm983
        %vm993 = vmand %vm966, %vm984
        %vm994 = vmand %vm967, %vm982
        %vm995 = vmand %vm967, %vm983
        %vm996 = vmand %vm967, %vm984
        %vm997 = vmand %vm968, %vm982
        %vm998 = vmand %vm968, %vm983
        %vm999 = vmand %vm968, %vm984
        %vm1000 = vmand %vm969, %vm982
        %vm1001 = vmand %vm969, %vm983
        %vm1002 = vmand %vm969, %vm984
        %vm1003 = vmand %vm970, %vm982
        %vm1004 = vmand %vm970, %vm983
        %vm1005 = vmand %vm970, %vm984
        %vm1006 = vmand %vm971, %vm982
        %vm1007 = vmand %vm971, %vm983
        %vm1008 = vmand %vm971, %vm984
        %vm1009 = vmand %vm972, %vm982
        %vm1010 = vmand %vm972, %vm983
        %vm1011 = vmand %vm972, %vm984
        %vm1012 = vmand %vm973, %vm982
        %vm1013 = vmand %vm973, %vm983
        %vm1014 = vmand %vm973, %vm984
        %vm1015 = vmand %vm974, %vm982
        %vm1016 = vmand %vm974, %vm983
        %vm1017 = vmand %vm974, %vm984
        %vm1018 = vmand %vm975, %vm982
        %vm1019 = vmand %vm975, %vm983
        %vm1020 = vmand %vm975, %vm984
        %vm1021 = vmand %vm976, %vm982
        %vm1022 = vmand %vm976, %vm983
        %vm1023 = vmand %vm976, %vm984
        %vm1024 = vmand %vm977, %vm982
        %vm1025 = vmand %vm977, %vm983
        %vm1026 = vmand %vm977, %vm984
        %vm1027 = vmand %vm978, %vm982
        %vm1028 = vmand %vm978, %vm983
        %vm1029 = vmand %vm978, %vm984
        %vm1030 = vmand %vm979, %vm982
        %vm1031 = vmand %vm979, %vm983
        %vm1032 = vmand %vm979, %vm984
        %vm1033 = vmand %vm980, %vm982
        %vm1034 = vmand %vm980, %vm983
        %vm1035 = vmand %vm980, %vm984
        %vm1036 = vmand %vm981, %vm982
        %vm1037 = vmand %vm981, %vm983
        %vm1038 = vmand %vm981, %vm984
        %vm1039 = vcmp.le.s32.totalorder %v925, 16
        %vm1040 = vcmp.le.s32.totalorder %v926, 16
        %vm1041 = vcmp.le.s32.totalorder %v927, 16
        %vm1042 = vmand %vm985, %vm1039
        %vm1043 = vmand %vm986, %vm1040
        %vm1044 = vmand %vm987, %vm1041
        %vm1045 = vmand %vm988, %vm1039
        %vm1046 = vmand %vm989, %vm1040
        %vm1047 = vmand %vm990, %vm1041
        %vm1048 = vmand %vm991, %vm1039
        %vm1049 = vmand %vm992, %vm1040
        %vm1050 = vmand %vm993, %vm1041
        %vm1051 = vmand %vm994, %vm1039
        %vm1052 = vmand %vm995, %vm1040
        %vm1053 = vmand %vm996, %vm1041
        %vm1054 = vmand %vm997, %vm1039
        %vm1055 = vmand %vm998, %vm1040
        %vm1056 = vmand %vm999, %vm1041
        %vm1057 = vmand %vm1000, %vm1039
        %vm1058 = vmand %vm1001, %vm1040
        %vm1059 = vmand %vm1002, %vm1041
        %vm1060 = vmand %vm1003, %vm1039
        %vm1061 = vmand %vm1004, %vm1040
        %vm1062 = vmand %vm1005, %vm1041
        %vm1063 = vmand %vm1006, %vm1039
        %vm1064 = vmand %vm1007, %vm1040
        %vm1065 = vmand %vm1008, %vm1041
        %vm1066 = vmand %vm1009, %vm1039
        %vm1067 = vmand %vm1010, %vm1040
        %vm1068 = vmand %vm1011, %vm1041
        %vm1069 = vmand %vm1012, %vm1039
        %vm1070 = vmand %vm1013, %vm1040
        %vm1071 = vmand %vm1014, %vm1041
        %vm1072 = vmand %vm1015, %vm1039
        %vm1073 = vmand %vm1016, %vm1040
        %vm1074 = vmand %vm1017, %vm1041
        %vm1075 = vmand %vm1018, %vm1039
        %vm1076 = vmand %vm1019, %vm1040
        %vm1077 = vmand %vm1020, %vm1041
        %vm1078 = vmand %vm1021, %vm1039
        %vm1079 = vmand %vm1022, %vm1040
        %vm1080 = vmand %vm1023, %vm1041
        %vm1081 = vmand %vm1024, %vm1039
        %vm1082 = vmand %vm1025, %vm1040
        %vm1083 = vmand %vm1026, %vm1041
        %vm1084 = vmand %vm1027, %vm1039
        %vm1085 = vmand %vm1028, %vm1040
        %vm1086 = vmand %vm1029, %vm1041
        %vm1087 = vmand %vm1030, %vm1039
        %vm1088 = vmand %vm1031, %vm1040
        %vm1089 = vmand %vm1032, %vm1041
        %vm1090 = vmand %vm1033, %vm1039
        %vm1091 = vmand %vm1034, %vm1040
        %vm1092 = vmand %vm1035, %vm1041
        %vm1093 = vmand %vm1036, %vm1039
        %vm1094 = vmand %vm1037, %vm1040
        %vm1095 = vmand %vm1038, %vm1041
        %v1096 = vsel %vm1042, 1, 0
        %v1097 = vsel %vm1043, 1, 0
        %v1098 = vsel %vm1044, 1, 0
        %v1099 = vsel %vm1045, 1, 0
        %v1100 = vsel %vm1046, 1, 0
        %v1101 = vsel %vm1047, 1, 0
        %v1102 = vsel %vm1048, 1, 0
        %v1103 = vsel %vm1049, 1, 0
        %v1104 = vsel %vm1050, 1, 0
        %v1105 = vsel %vm1051, 1, 0
        %v1106 = vsel %vm1052, 1, 0
        %v1107 = vsel %vm1053, 1, 0
        %v1108 = vsel %vm1054, 1, 0
        %v1109 = vsel %vm1055, 1, 0
        %v1110 = vsel %vm1056, 1, 0
        %v1111 = vsel %vm1057, 1, 0
        %v1112 = vsel %vm1058, 1, 0
        %v1113 = vsel %vm1059, 1, 0
        %v1114 = vsel %vm1060, 1, 0
        %v1115 = vsel %vm1061, 1, 0
        %v1116 = vsel %vm1062, 1, 0
        %v1117 = vsel %vm1063, 1, 0
        %v1118 = vsel %vm1064, 1, 0
        %v1119 = vsel %vm1065, 1, 0
        %v1120 = vsel %vm1066, 1, 0
        %v1121 = vsel %vm1067, 1, 0
        %v1122 = vsel %vm1068, 1, 0
        %v1123 = vsel %vm1069, 1, 0
        %v1124 = vsel %vm1070, 1, 0
        %v1125 = vsel %vm1071, 1, 0
        %v1126 = vsel %vm1072, 1, 0
        %v1127 = vsel %vm1073, 1, 0
        %v1128 = vsel %vm1074, 1, 0
        %v1129 = vsel %vm1075, 1, 0
        %v1130 = vsel %vm1076, 1, 0
        %v1131 = vsel %vm1077, 1, 0
        %v1132 = vsel %vm1078, 1, 0
        %v1133 = vsel %vm1079, 1, 0
        %v1134 = vsel %vm1080, 1, 0
        %v1135 = vsel %vm1081, 1, 0
        %v1136 = vsel %vm1082, 1, 0
        %v1137 = vsel %vm1083, 1, 0
        %v1138 = vsel %vm1084, 1, 0
        %v1139 = vsel %vm1085, 1, 0
        %v1140 = vsel %vm1086, 1, 0
        %v1141 = vsel %vm1087, 1, 0
        %v1142 = vsel %vm1088, 1, 0
        %v1143 = vsel %vm1089, 1, 0
        %v1144 = vsel %vm1090, 1, 0
        %v1145 = vsel %vm1091, 1, 0
        %v1146 = vsel %vm1092, 1, 0
        %v1147 = vsel %vm1093, 1, 0
        %v1148 = vsel %vm1094, 1, 0
        %v1149 = vsel %vm1095, 1, 0
        %vm1150 = vcmp.eq.s32.totalorder %v1096, 1
        %vm1151 = vcmp.eq.s32.totalorder %v1097, 1
        %vm1152 = vcmp.eq.s32.totalorder %v1098, 1
        %vm1153 = vcmp.eq.s32.totalorder %v1099, 1
        %vm1154 = vcmp.eq.s32.totalorder %v1100, 1
        %vm1155 = vcmp.eq.s32.totalorder %v1101, 1
        %vm1156 = vcmp.eq.s32.totalorder %v1102, 1
        %vm1157 = vcmp.eq.s32.totalorder %v1103, 1
        %vm1158 = vcmp.eq.s32.totalorder %v1104, 1
        %vm1159 = vcmp.eq.s32.totalorder %v1105, 1
        %vm1160 = vcmp.eq.s32.totalorder %v1106, 1
        %vm1161 = vcmp.eq.s32.totalorder %v1107, 1
        %vm1162 = vcmp.eq.s32.totalorder %v1108, 1
        %vm1163 = vcmp.eq.s32.totalorder %v1109, 1
        %vm1164 = vcmp.eq.s32.totalorder %v1110, 1
        %vm1165 = vcmp.eq.s32.totalorder %v1111, 1
        %vm1166 = vcmp.eq.s32.totalorder %v1112, 1
        %vm1167 = vcmp.eq.s32.totalorder %v1113, 1
        %vm1168 = vcmp.eq.s32.totalorder %v1114, 1
        %vm1169 = vcmp.eq.s32.totalorder %v1115, 1
        %vm1170 = vcmp.eq.s32.totalorder %v1116, 1
        %vm1171 = vcmp.eq.s32.totalorder %v1117, 1
        %vm1172 = vcmp.eq.s32.totalorder %v1118, 1
        %vm1173 = vcmp.eq.s32.totalorder %v1119, 1
        %vm1174 = vcmp.eq.s32.totalorder %v1120, 1
        %vm1175 = vcmp.eq.s32.totalorder %v1121, 1
        %vm1176 = vcmp.eq.s32.totalorder %v1122, 1
        %vm1177 = vcmp.eq.s32.totalorder %v1123, 1
        %vm1178 = vcmp.eq.s32.totalorder %v1124, 1
        %vm1179 = vcmp.eq.s32.totalorder %v1125, 1
        %vm1180 = vcmp.eq.s32.totalorder %v1126, 1
        %vm1181 = vcmp.eq.s32.totalorder %v1127, 1
        %vm1182 = vcmp.eq.s32.totalorder %v1128, 1
        %vm1183 = vcmp.eq.s32.totalorder %v1129, 1
        %vm1184 = vcmp.eq.s32.totalorder %v1130, 1
        %vm1185 = vcmp.eq.s32.totalorder %v1131, 1
        %vm1186 = vcmp.eq.s32.totalorder %v1132, 1
        %vm1187 = vcmp.eq.s32.totalorder %v1133, 1
        %vm1188 = vcmp.eq.s32.totalorder %v1134, 1
        %vm1189 = vcmp.eq.s32.totalorder %v1135, 1
        %vm1190 = vcmp.eq.s32.totalorder %v1136, 1
        %vm1191 = vcmp.eq.s32.totalorder %v1137, 1
        %vm1192 = vcmp.eq.s32.totalorder %v1138, 1
        %vm1193 = vcmp.eq.s32.totalorder %v1139, 1
        %vm1194 = vcmp.eq.s32.totalorder %v1140, 1
        %vm1195 = vcmp.eq.s32.totalorder %v1141, 1
        %vm1196 = vcmp.eq.s32.totalorder %v1142, 1
        %vm1197 = vcmp.eq.s32.totalorder %v1143, 1
        %vm1198 = vcmp.eq.s32.totalorder %v1144, 1
        %vm1199 = vcmp.eq.s32.totalorder %v1145, 1
        %vm1200 = vcmp.eq.s32.totalorder %v1146, 1
        %vm1201 = vcmp.eq.s32.totalorder %v1147, 1
        %vm1202 = vcmp.eq.s32.totalorder %v1148, 1
        %vm1203 = vcmp.eq.s32.totalorder %v1149, 1
        %v1204 = vsel %vm1150, %v852, 0.0
        %v1205 = vsel %vm1151, %v853, 0.0
        %v1206 = vsel %vm1152, %v854, 0.0
        %v1207 = vsel %vm1153, %v855, 0.0
        %v1208 = vsel %vm1154, %v856, 0.0
        %v1209 = vsel %vm1155, %v857, 0.0
        %v1210 = vsel %vm1156, %v858, 0.0
        %v1211 = vsel %vm1157, %v859, 0.0
        %v1212 = vsel %vm1158, %v860, 0.0
        %v1213 = vsel %vm1159, %v861, 0.0
        %v1214 = vsel %vm1160, %v862, 0.0
        %v1215 = vsel %vm1161, %v863, 0.0
        %v1216 = vsel %vm1162, %v864, 0.0
        %v1217 = vsel %vm1163, %v865, 0.0
        %v1218 = vsel %vm1164, %v866, 0.0
        %v1219 = vsel %vm1165, %v867, 0.0
        %v1220 = vsel %vm1166, %v868, 0.0
        %v1221 = vsel %vm1167, %v869, 0.0
        %v1222 = vsel %vm1168, %v870, 0.0
        %v1223 = vsel %vm1169, %v871, 0.0
        %v1224 = vsel %vm1170, %v872, 0.0
        %v1225 = vsel %vm1171, %v873, 0.0
        %v1226 = vsel %vm1172, %v874, 0.0
        %v1227 = vsel %vm1173, %v875, 0.0
        %v1228 = vsel %vm1174, %v876, 0.0
        %v1229 = vsel %vm1175, %v877, 0.0
        %v1230 = vsel %vm1176, %v878, 0.0
        %v1231 = vsel %vm1177, %v879, 0.0
        %v1232 = vsel %vm1178, %v880, 0.0
        %v1233 = vsel %vm1179, %v881, 0.0
        %v1234 = vsel %vm1180, %v882, 0.0
        %v1235 = vsel %vm1181, %v883, 0.0
        %v1236 = vsel %vm1182, %v884, 0.0
        %v1237 = vsel %vm1183, %v885, 0.0
        %v1238 = vsel %vm1184, %v886, 0.0
        %v1239 = vsel %vm1185, %v887, 0.0
        %v1240 = vsel %vm1186, %v888, 0.0
        %v1241 = vsel %vm1187, %v889, 0.0
        %v1242 = vsel %vm1188, %v890, 0.0
        %v1243 = vsel %vm1189, %v891, 0.0
        %v1244 = vsel %vm1190, %v892, 0.0
        %v1245 = vsel %vm1191, %v893, 0.0
        %v1246 = vsel %vm1192, %v894, 0.0
        %v1247 = vsel %vm1193, %v895, 0.0
        %v1248 = vsel %vm1194, %v896, 0.0
        %v1249 = vsel %vm1195, %v897, 0.0
        %v1250 = vsel %vm1196, %v898, 0.0
        %v1251 = vsel %vm1197, %v899, 0.0
        %v1252 = vsel %vm1198, %v900, 0.0
        %v1253 = vsel %vm1199, %v901, 0.0
        %v1254 = vsel %vm1200, %v902, 0.0
        %v1255 = vsel %vm1201, %v903, 0.0
        %v1256 = vsel %vm1202, %v904, 0.0
        %v1257 = vsel %vm1203, %v905, 0.0
        %v1258 = vld [vmem:[#allocation8] sm:$0xff]
        %v1259 = vld [vmem:[#allocation8 + $0x8] sm:$0x1]
        %v1260 = vlaneseq
        %v1261 = vshrl.u32 %v1260, 7
        %v1262 = vsub.s32 0, %v1261
        %v1263 = vrot.slane %v1258, %v1262
        %v1264 = vmul.f32 %v1204, %v1263
        %v1265 = vmul.f32 %v1205, %v1263
        %v1266 = vmul.f32 %v1207, %v1263
        %v1267 = vmul.f32 %v1208, %v1263
        %v1268 = vmul.f32 %v1210, %v1263
        %v1269 = vmul.f32 %v1211, %v1263
        %v1270 = vmul.f32 %v1213, %v1263
        %v1271 = vmul.f32 %v1214, %v1263
        %v1272 = vmul.f32 %v1216, %v1263
        %v1273 = vmul.f32 %v1217, %v1263
        %v1274 = vmul.f32 %v1219, %v1263
        %v1275 = vmul.f32 %v1220, %v1263
        %v1276 = vmul.f32 %v1222, %v1263
        %v1277 = vmul.f32 %v1223, %v1263
        %v1278 = vmul.f32 %v1225, %v1263
        %v1279 = vmul.f32 %v1226, %v1263
        %v1280 = vmul.f32 %v1228, %v1263
        %v1281 = vmul.f32 %v1229, %v1263
        %v1282 = vmul.f32 %v1231, %v1263
        %v1283 = vmul.f32 %v1232, %v1263
        %v1284 = vmul.f32 %v1234, %v1263
        %v1285 = vmul.f32 %v1235, %v1263
        %v1286 = vmul.f32 %v1237, %v1263
        %v1287 = vmul.f32 %v1238, %v1263
        %v1288 = vmul.f32 %v1240, %v1263
        %v1289 = vmul.f32 %v1241, %v1263
        %v1290 = vmul.f32 %v1243, %v1263
        %v1291 = vmul.f32 %v1244, %v1263
        %v1292 = vmul.f32 %v1246, %v1263
        %v1293 = vmul.f32 %v1247, %v1263
        %v1294 = vmul.f32 %v1249, %v1263
        %v1295 = vmul.f32 %v1250, %v1263
        %v1296 = vadd.f32 %v1264, 0.0
        %v1297 = vadd.f32 %v1265, 0.0
        %v1298 = vadd.f32 %v1266, 0.0
        %v1299 = vadd.f32 %v1267, 0.0
        %v1300 = vadd.f32 %v1268, 0.0
        %v1301 = vadd.f32 %v1269, 0.0
        %v1302 = vadd.f32 %v1270, 0.0
        %v1303 = vadd.f32 %v1271, 0.0
        %v1304 = vadd.f32 %v1272, 0.0
        %v1305 = vadd.f32 %v1273, 0.0
        %v1306 = vadd.f32 %v1274, 0.0
        %v1307 = vadd.f32 %v1275, 0.0
        %v1308 = vadd.f32 %v1276, 0.0
        %v1309 = vadd.f32 %v1277, 0.0
        %v1310 = vadd.f32 %v1278, 0.0
        %v1311 = vadd.f32 %v1279, 0.0
        %v1312 = vadd.f32 %v1280, 0.0
        %v1313 = vadd.f32 %v1281, 0.0
        %v1314 = vadd.f32 %v1282, 0.0
        %v1315 = vadd.f32 %v1283, 0.0
        %v1316 = vadd.f32 %v1284, 0.0
        %v1317 = vadd.f32 %v1285, 0.0
        %v1318 = vadd.f32 %v1286, 0.0
        %v1319 = vadd.f32 %v1287, 0.0
        %v1320 = vadd.f32 %v1288, 0.0
        %v1321 = vadd.f32 %v1289, 0.0
        %v1322 = vadd.f32 %v1290, 0.0
        %v1323 = vadd.f32 %v1291, 0.0
        %v1324 = vadd.f32 %v1292, 0.0
        %v1325 = vadd.f32 %v1293, 0.0
        %v1326 = vadd.f32 %v1294, 0.0
        %v1327 = vadd.f32 %v1295, 0.0
        %v1328 = vlaneseq
        %v1329 = vshrl.u32 %v1328, 7
        %v1330 = vsub.s32 3, %v1329
        %v1331 = vrot.slane %v1258, %v1330
        %v1332 = vmul.f32 %v1207, %v1331
        %v1333 = vmul.f32 %v1208, %v1331
        %v1334 = vmul.f32 %v1210, %v1331
        %v1335 = vmul.f32 %v1211, %v1331
        %v1336 = vmul.f32 %v1213, %v1331
        %v1337 = vmul.f32 %v1214, %v1331
        %v1338 = vmul.f32 %v1216, %v1331
        %v1339 = vmul.f32 %v1217, %v1331
        %v1340 = vmul.f32 %v1219, %v1331
        %v1341 = vmul.f32 %v1220, %v1331
        %v1342 = vmul.f32 %v1222, %v1331
        %v1343 = vmul.f32 %v1223, %v1331
        %v1344 = vmul.f32 %v1225, %v1331
        %v1345 = vmul.f32 %v1226, %v1331
        %v1346 = vmul.f32 %v1228, %v1331
        %v1347 = vmul.f32 %v1229, %v1331
        %v1348 = vmul.f32 %v1231, %v1331
        %v1349 = vmul.f32 %v1232, %v1331
        %v1350 = vmul.f32 %v1234, %v1331
        %v1351 = vmul.f32 %v1235, %v1331
        %v1352 = vmul.f32 %v1237, %v1331
        %v1353 = vmul.f32 %v1238, %v1331
        %v1354 = vmul.f32 %v1240, %v1331
        %v1355 = vmul.f32 %v1241, %v1331
        %v1356 = vmul.f32 %v1243, %v1331
        %v1357 = vmul.f32 %v1244, %v1331
        %v1358 = vmul.f32 %v1246, %v1331
        %v1359 = vmul.f32 %v1247, %v1331
        %v1360 = vmul.f32 %v1249, %v1331
        %v1361 = vmul.f32 %v1250, %v1331
        %v1362 = vmul.f32 %v1252, %v1331
        %v1363 = vmul.f32 %v1253, %v1331
        %v1364 = vadd.f32 %v1296, %v1332
        %v1365 = vadd.f32 %v1297, %v1333
        %v1366 = vadd.f32 %v1298, %v1334
        %v1367 = vadd.f32 %v1299, %v1335
        %v1368 = vadd.f32 %v1300, %v1336
        %v1369 = vadd.f32 %v1301, %v1337
        %v1370 = vadd.f32 %v1302, %v1338
        %v1371 = vadd.f32 %v1303, %v1339
        %v1372 = vadd.f32 %v1304, %v1340
        %v1373 = vadd.f32 %v1305, %v1341
        %v1374 = vadd.f32 %v1306, %v1342
        %v1375 = vadd.f32 %v1307, %v1343
        %v1376 = vadd.f32 %v1308, %v1344
        %v1377 = vadd.f32 %v1309, %v1345
        %v1378 = vadd.f32 %v1310, %v1346
        %v1379 = vadd.f32 %v1311, %v1347
        %v1380 = vadd.f32 %v1312, %v1348
        %v1381 = vadd.f32 %v1313, %v1349
        %v1382 = vadd.f32 %v1314, %v1350
        %v1383 = vadd.f32 %v1315, %v1351
        %v1384 = vadd.f32 %v1316, %v1352
        %v1385 = vadd.f32 %v1317, %v1353
        %v1386 = vadd.f32 %v1318, %v1354
        %v1387 = vadd.f32 %v1319, %v1355
        %v1388 = vadd.f32 %v1320, %v1356
        %v1389 = vadd.f32 %v1321, %v1357
        %v1390 = vadd.f32 %v1322, %v1358
        %v1391 = vadd.f32 %v1323, %v1359
        %v1392 = vadd.f32 %v1324, %v1360
        %v1393 = vadd.f32 %v1325, %v1361
        %v1394 = vadd.f32 %v1326, %v1362
        %v1395 = vadd.f32 %v1327, %v1363
        %v1396 = vlaneseq
        %v1397 = vshrl.u32 %v1396, 7
        %v1398 = vsub.s32 6, %v1397
        %v1399 = vrot.slane %v1258, %v1398
        %v1400 = vmul.f32 %v1210, %v1399
        %v1401 = vmul.f32 %v1211, %v1399
        %v1402 = vmul.f32 %v1213, %v1399
        %v1403 = vmul.f32 %v1214, %v1399
        %v1404 = vmul.f32 %v1216, %v1399
        %v1405 = vmul.f32 %v1217, %v1399
        %v1406 = vmul.f32 %v1219, %v1399
        %v1407 = vmul.f32 %v1220, %v1399
        %v1408 = vmul.f32 %v1222, %v1399
        %v1409 = vmul.f32 %v1223, %v1399
        %v1410 = vmul.f32 %v1225, %v1399
        %v1411 = vmul.f32 %v1226, %v1399
        %v1412 = vmul.f32 %v1228, %v1399
        %v1413 = vmul.f32 %v1229, %v1399
        %v1414 = vmul.f32 %v1231, %v1399
        %v1415 = vmul.f32 %v1232, %v1399
        %v1416 = vmul.f32 %v1234, %v1399
        %v1417 = vmul.f32 %v1235, %v1399
        %v1418 = vmul.f32 %v1237, %v1399
        %v1419 = vmul.f32 %v1238, %v1399
        %v1420 = vmul.f32 %v1240, %v1399
        %v1421 = vmul.f32 %v1241, %v1399
        %v1422 = vmul.f32 %v1243, %v1399
        %v1423 = vmul.f32 %v1244, %v1399
        %v1424 = vmul.f32 %v1246, %v1399
        %v1425 = vmul.f32 %v1247, %v1399
        %v1426 = vmul.f32 %v1249, %v1399
        %v1427 = vmul.f32 %v1250, %v1399
        %v1428 = vmul.f32 %v1252, %v1399
        %v1429 = vmul.f32 %v1253, %v1399
        %v1430 = vmul.f32 %v1255, %v1399
        %v1431 = vmul.f32 %v1256, %v1399
        %v1432 = vadd.f32 %v1364, %v1400
        %v1433 = vadd.f32 %v1365, %v1401
        %v1434 = vadd.f32 %v1366, %v1402
        %v1435 = vadd.f32 %v1367, %v1403
        %v1436 = vadd.f32 %v1368, %v1404
        %v1437 = vadd.f32 %v1369, %v1405
        %v1438 = vadd.f32 %v1370, %v1406
        %v1439 = vadd.f32 %v1371, %v1407
        %v1440 = vadd.f32 %v1372, %v1408
        %v1441 = vadd.f32 %v1373, %v1409
        %v1442 = vadd.f32 %v1374, %v1410
        %v1443 = vadd.f32 %v1375, %v1411
        %v1444 = vadd.f32 %v1376, %v1412
        %v1445 = vadd.f32 %v1377, %v1413
        %v1446 = vadd.f32 %v1378, %v1414
        %v1447 = vadd.f32 %v1379, %v1415
        %v1448 = vadd.f32 %v1380, %v1416
        %v1449 = vadd.f32 %v1381, %v1417
        %v1450 = vadd.f32 %v1382, %v1418
        %v1451 = vadd.f32 %v1383, %v1419
        %v1452 = vadd.f32 %v1384, %v1420
        %v1453 = vadd.f32 %v1385, %v1421
        %v1454 = vadd.f32 %v1386, %v1422
        %v1455 = vadd.f32 %v1387, %v1423
        %v1456 = vadd.f32 %v1388, %v1424
        %v1457 = vadd.f32 %v1389, %v1425
        %v1458 = vadd.f32 %v1390, %v1426
        %v1459 = vadd.f32 %v1391, %v1427
        %v1460 = vadd.f32 %v1392, %v1428
        %v1461 = vadd.f32 %v1393, %v1429
        %v1462 = vadd.f32 %v1394, %v1430
        %v1463 = vadd.f32 %v1395, %v1431
        %v1464 = vrot.slane %v1204, 1
        %v1465 = vrot.slane %v1207, 1
        %v1466 = vrot.slane %v1210, 1
        %v1467 = vrot.slane %v1213, 1
        %v1468 = vrot.slane %v1216, 1
        %v1469 = vrot.slane %v1219, 1
        %v1470 = vrot.slane %v1222, 1
        %v1471 = vrot.slane %v1225, 1
        %v1472 = vrot.slane %v1228, 1
        %v1473 = vrot.slane %v1231, 1
        %v1474 = vrot.slane %v1234, 1
        %v1475 = vrot.slane %v1237, 1
        %v1476 = vrot.slane %v1240, 1
        %v1477 = vrot.slane %v1243, 1
        %v1478 = vrot.slane %v1246, 1
        %v1479 = vrot.slane %v1249, 1
        %v1480 = vrot.slane %v1252, 1
        %v1481 = vrot.slane %v1255, 1
        %v1482 = vrot.slane %v1205, 1
        %v1483 = vrot.slane %v1208, 1
        %v1484 = vrot.slane %v1211, 1
        %v1485 = vrot.slane %v1214, 1
        %v1486 = vrot.slane %v1217, 1
        %v1487 = vrot.slane %v1220, 1
        %v1488 = vrot.slane %v1223, 1
        %v1489 = vrot.slane %v1226, 1
        %v1490 = vrot.slane %v1229, 1
        %v1491 = vrot.slane %v1232, 1
        %v1492 = vrot.slane %v1235, 1
        %v1493 = vrot.slane %v1238, 1
        %v1494 = vrot.slane %v1241, 1
        %v1495 = vrot.slane %v1244, 1
        %v1496 = vrot.slane %v1247, 1
        %v1497 = vrot.slane %v1250, 1
        %v1498 = vrot.slane %v1253, 1
        %v1499 = vrot.slane %v1256, 1
        %v1500 = vrot.slane %v1206, 1
        %v1501 = vrot.slane %v1209, 1
        %v1502 = vrot.slane %v1212, 1
        %v1503 = vrot.slane %v1215, 1
        %v1504 = vrot.slane %v1218, 1
        %v1505 = vrot.slane %v1221, 1
        %v1506 = vrot.slane %v1224, 1
        %v1507 = vrot.slane %v1227, 1
        %v1508 = vrot.slane %v1230, 1
        %v1509 = vrot.slane %v1233, 1
        %v1510 = vrot.slane %v1236, 1
        %v1511 = vrot.slane %v1239, 1
        %v1512 = vrot.slane %v1242, 1
        %v1513 = vrot.slane %v1245, 1
        %v1514 = vrot.slane %v1248, 1
        %v1515 = vrot.slane %v1251, 1
        %v1516 = vrot.slane %v1254, 1
        %v1517 = vrot.slane %v1257, 1
        %vm1518 = vcmp.lt.s32.totalorder %v925, 7
        %v1519 = vsel %vm1518, %v1482, %v1500
        %v1520 = vsel %vm1518, %v1483, %v1501
        %v1521 = vsel %vm1518, %v1484, %v1502
        %v1522 = vsel %vm1518, %v1485, %v1503
        %v1523 = vsel %vm1518, %v1486, %v1504
        %v1524 = vsel %vm1518, %v1487, %v1505
        %v1525 = vsel %vm1518, %v1488, %v1506
        %v1526 = vsel %vm1518, %v1489, %v1507
        %v1527 = vsel %vm1518, %v1490, %v1508
        %v1528 = vsel %vm1518, %v1491, %v1509
        %v1529 = vsel %vm1518, %v1492, %v1510
        %v1530 = vsel %vm1518, %v1493, %v1511
        %v1531 = vsel %vm1518, %v1494, %v1512
        %v1532 = vsel %vm1518, %v1495, %v1513
        %v1533 = vsel %vm1518, %v1496, %v1514
        %v1534 = vsel %vm1518, %v1497, %v1515
        %v1535 = vsel %vm1518, %v1498, %v1516
        %v1536 = vsel %vm1518, %v1499, %v1517
        %v1537 = vsel %vm1518, %v1464, %v1482
        %v1538 = vsel %vm1518, %v1465, %v1483
        %v1539 = vsel %vm1518, %v1466, %v1484
        %v1540 = vsel %vm1518, %v1467, %v1485
        %v1541 = vsel %vm1518, %v1468, %v1486
        %v1542 = vsel %vm1518, %v1469, %v1487
        %v1543 = vsel %vm1518, %v1470, %v1488
        %v1544 = vsel %vm1518, %v1471, %v1489
        %v1545 = vsel %vm1518, %v1472, %v1490
        %v1546 = vsel %vm1518, %v1473, %v1491
        %v1547 = vsel %vm1518, %v1474, %v1492
        %v1548 = vsel %vm1518, %v1475, %v1493
        %v1549 = vsel %vm1518, %v1476, %v1494
        %v1550 = vsel %vm1518, %v1477, %v1495
        %v1551 = vsel %vm1518, %v1478, %v1496
        %v1552 = vsel %vm1518, %v1479, %v1497
        %v1553 = vsel %vm1518, %v1480, %v1498
        %v1554 = vsel %vm1518, %v1481, %v1499
        %v1555 = vlaneseq
        %v1556 = vshrl.u32 %v1555, 7
        %v1557 = vsub.s32 1, %v1556
        %v1558 = vrot.slane %v1258, %v1557
        %v1559 = vmul.f32 %v1537, %v1558
        %v1560 = vmul.f32 %v1519, %v1558
        %v1561 = vmul.f32 %v1538, %v1558
        %v1562 = vmul.f32 %v1520, %v1558
        %v1563 = vmul.f32 %v1539, %v1558
        %v1564 = vmul.f32 %v1521, %v1558
        %v1565 = vmul.f32 %v1540, %v1558
        %v1566 = vmul.f32 %v1522, %v1558
        %v1567 = vmul.f32 %v1541, %v1558
        %v1568 = vmul.f32 %v1523, %v1558
        %v1569 = vmul.f32 %v1542, %v1558
        %v1570 = vmul.f32 %v1524, %v1558
        %v1571 = vmul.f32 %v1543, %v1558
        %v1572 = vmul.f32 %v1525, %v1558
        %v1573 = vmul.f32 %v1544, %v1558
        %v1574 = vmul.f32 %v1526, %v1558
        %v1575 = vmul.f32 %v1545, %v1558
        %v1576 = vmul.f32 %v1527, %v1558
        %v1577 = vmul.f32 %v1546, %v1558
        %v1578 = vmul.f32 %v1528, %v1558
        %v1579 = vmul.f32 %v1547, %v1558
        %v1580 = vmul.f32 %v1529, %v1558
        %v1581 = vmul.f32 %v1548, %v1558
        %v1582 = vmul.f32 %v1530, %v1558
        %v1583 = vmul.f32 %v1549, %v1558
        %v1584 = vmul.f32 %v1531, %v1558
        %v1585 = vmul.f32 %v1550, %v1558
        %v1586 = vmul.f32 %v1532, %v1558
        %v1587 = vmul.f32 %v1551, %v1558
        %v1588 = vmul.f32 %v1533, %v1558
        %v1589 = vmul.f32 %v1552, %v1558
        %v1590 = vmul.f32 %v1534, %v1558
        %v1591 = vadd.f32 %v1432, %v1559
        %v1592 = vadd.f32 %v1433, %v1560
        %v1593 = vadd.f32 %v1434, %v1561
        %v1594 = vadd.f32 %v1435, %v1562
        %v1595 = vadd.f32 %v1436, %v1563
        %v1596 = vadd.f32 %v1437, %v1564
        %v1597 = vadd.f32 %v1438, %v1565
        %v1598 = vadd.f32 %v1439, %v1566
        %v1599 = vadd.f32 %v1440, %v1567
        %v1600 = vadd.f32 %v1441, %v1568
        %v1601 = vadd.f32 %v1442, %v1569
        %v1602 = vadd.f32 %v1443, %v1570
        %v1603 = vadd.f32 %v1444, %v1571
        %v1604 = vadd.f32 %v1445, %v1572
        %v1605 = vadd.f32 %v1446, %v1573
        %v1606 = vadd.f32 %v1447, %v1574
        %v1607 = vadd.f32 %v1448, %v1575
        %v1608 = vadd.f32 %v1449, %v1576
        %v1609 = vadd.f32 %v1450, %v1577
        %v1610 = vadd.f32 %v1451, %v1578
        %v1611 = vadd.f32 %v1452, %v1579
        %v1612 = vadd.f32 %v1453, %v1580
        %v1613 = vadd.f32 %v1454, %v1581
        %v1614 = vadd.f32 %v1455, %v1582
        %v1615 = vadd.f32 %v1456, %v1583
        %v1616 = vadd.f32 %v1457, %v1584
        %v1617 = vadd.f32 %v1458, %v1585
        %v1618 = vadd.f32 %v1459, %v1586
        %v1619 = vadd.f32 %v1460, %v1587
        %v1620 = vadd.f32 %v1461, %v1588
        %v1621 = vadd.f32 %v1462, %v1589
        %v1622 = vadd.f32 %v1463, %v1590
        %v1623 = vlaneseq
        %v1624 = vshrl.u32 %v1623, 7
        %v1625 = vsub.s32 4, %v1624
        %v1626 = vrot.slane %v1258, %v1625
        %v1627 = vmul.f32 %v1538, %v1626
        %v1628 = vmul.f32 %v1520, %v1626
        %v1629 = vmul.f32 %v1539, %v1626
        %v1630 = vmul.f32 %v1521, %v1626
        %v1631 = vmul.f32 %v1540, %v1626
        %v1632 = vmul.f32 %v1522, %v1626
        %v1633 = vmul.f32 %v1541, %v1626
        %v1634 = vmul.f32 %v1523, %v1626
        %v1635 = vmul.f32 %v1542, %v1626
        %v1636 = vmul.f32 %v1524, %v1626
        %v1637 = vmul.f32 %v1543, %v1626
        %v1638 = vmul.f32 %v1525, %v1626
        %v1639 = vmul.f32 %v1544, %v1626
        %v1640 = vmul.f32 %v1526, %v1626
        %v1641 = vmul.f32 %v1545, %v1626
        %v1642 = vmul.f32 %v1527, %v1626
        %v1643 = vmul.f32 %v1546, %v1626
        %v1644 = vmul.f32 %v1528, %v1626
        %v1645 = vmul.f32 %v1547, %v1626
        %v1646 = vmul.f32 %v1529, %v1626
        %v1647 = vmul.f32 %v1548, %v1626
        %v1648 = vmul.f32 %v1530, %v1626
        %v1649 = vmul.f32 %v1549, %v1626
        %v1650 = vmul.f32 %v1531, %v1626
        %v1651 = vmul.f32 %v1550, %v1626
        %v1652 = vmul.f32 %v1532, %v1626
        %v1653 = vmul.f32 %v1551, %v1626
        %v1654 = vmul.f32 %v1533, %v1626
        %v1655 = vmul.f32 %v1552, %v1626
        %v1656 = vmul.f32 %v1534, %v1626
        %v1657 = vmul.f32 %v1553, %v1626
        %v1658 = vmul.f32 %v1535, %v1626
        %v1659 = vadd.f32 %v1591, %v1627
        %v1660 = vadd.f32 %v1592, %v1628
        %v1661 = vadd.f32 %v1593, %v1629
        %v1662 = vadd.f32 %v1594, %v1630
        %v1663 = vadd.f32 %v1595, %v1631
        %v1664 = vadd.f32 %v1596, %v1632
        %v1665 = vadd.f32 %v1597, %v1633
        %v1666 = vadd.f32 %v1598, %v1634
        %v1667 = vadd.f32 %v1599, %v1635
        %v1668 = vadd.f32 %v1600, %v1636
        %v1669 = vadd.f32 %v1601, %v1637
        %v1670 = vadd.f32 %v1602, %v1638
        %v1671 = vadd.f32 %v1603, %v1639
        %v1672 = vadd.f32 %v1604, %v1640
        %v1673 = vadd.f32 %v1605, %v1641
        %v1674 = vadd.f32 %v1606, %v1642
        %v1675 = vadd.f32 %v1607, %v1643
        %v1676 = vadd.f32 %v1608, %v1644
        %v1677 = vadd.f32 %v1609, %v1645
        %v1678 = vadd.f32 %v1610, %v1646
        %v1679 = vadd.f32 %v1611, %v1647
        %v1680 = vadd.f32 %v1612, %v1648
        %v1681 = vadd.f32 %v1613, %v1649
        %v1682 = vadd.f32 %v1614, %v1650
        %v1683 = vadd.f32 %v1615, %v1651
        %v1684 = vadd.f32 %v1616, %v1652
        %v1685 = vadd.f32 %v1617, %v1653
        %v1686 = vadd.f32 %v1618, %v1654
        %v1687 = vadd.f32 %v1619, %v1655
        %v1688 = vadd.f32 %v1620, %v1656
        %v1689 = vadd.f32 %v1621, %v1657
        %v1690 = vadd.f32 %v1622, %v1658
        %v1691 = vlaneseq
        %v1692 = vshrl.u32 %v1691, 7
        %v1693 = vsub.s32 7, %v1692
        %v1694 = vrot.slane %v1258, %v1693
        %v1695 = vmul.f32 %v1539, %v1694
        %v1696 = vmul.f32 %v1521, %v1694
        %v1697 = vmul.f32 %v1540, %v1694
        %v1698 = vmul.f32 %v1522, %v1694
        %v1699 = vmul.f32 %v1541, %v1694
        %v1700 = vmul.f32 %v1523, %v1694
        %v1701 = vmul.f32 %v1542, %v1694
        %v1702 = vmul.f32 %v1524, %v1694
        %v1703 = vmul.f32 %v1543, %v1694
        %v1704 = vmul.f32 %v1525, %v1694
        %v1705 = vmul.f32 %v1544, %v1694
        %v1706 = vmul.f32 %v1526, %v1694
        %v1707 = vmul.f32 %v1545, %v1694
        %v1708 = vmul.f32 %v1527, %v1694
        %v1709 = vmul.f32 %v1546, %v1694
        %v1710 = vmul.f32 %v1528, %v1694
        %v1711 = vmul.f32 %v1547, %v1694
        %v1712 = vmul.f32 %v1529, %v1694
        %v1713 = vmul.f32 %v1548, %v1694
        %v1714 = vmul.f32 %v1530, %v1694
        %v1715 = vmul.f32 %v1549, %v1694
        %v1716 = vmul.f32 %v1531, %v1694
        %v1717 = vmul.f32 %v1550, %v1694
        %v1718 = vmul.f32 %v1532, %v1694
        %v1719 = vmul.f32 %v1551, %v1694
        %v1720 = vmul.f32 %v1533, %v1694
        %v1721 = vmul.f32 %v1552, %v1694
        %v1722 = vmul.f32 %v1534, %v1694
        %v1723 = vmul.f32 %v1553, %v1694
        %v1724 = vmul.f32 %v1535, %v1694
        %v1725 = vmul.f32 %v1554, %v1694
        %v1726 = vmul.f32 %v1536, %v1694
        %v1727 = vadd.f32 %v1659, %v1695
        %v1728 = vadd.f32 %v1660, %v1696
        %v1729 = vadd.f32 %v1661, %v1697
        %v1730 = vadd.f32 %v1662, %v1698
        %v1731 = vadd.f32 %v1663, %v1699
        %v1732 = vadd.f32 %v1664, %v1700
        %v1733 = vadd.f32 %v1665, %v1701
        %v1734 = vadd.f32 %v1666, %v1702
        %v1735 = vadd.f32 %v1667, %v1703
        %v1736 = vadd.f32 %v1668, %v1704
        %v1737 = vadd.f32 %v1669, %v1705
        %v1738 = vadd.f32 %v1670, %v1706
        %v1739 = vadd.f32 %v1671, %v1707
        %v1740 = vadd.f32 %v1672, %v1708
        %v1741 = vadd.f32 %v1673, %v1709
        %v1742 = vadd.f32 %v1674, %v1710
        %v1743 = vadd.f32 %v1675, %v1711
        %v1744 = vadd.f32 %v1676, %v1712
        %v1745 = vadd.f32 %v1677, %v1713
        %v1746 = vadd.f32 %v1678, %v1714
        %v1747 = vadd.f32 %v1679, %v1715
        %v1748 = vadd.f32 %v1680, %v1716
        %v1749 = vadd.f32 %v1681, %v1717
        %v1750 = vadd.f32 %v1682, %v1718
        %v1751 = vadd.f32 %v1683, %v1719
        %v1752 = vadd.f32 %v1684, %v1720
        %v1753 = vadd.f32 %v1685, %v1721
        %v1754 = vadd.f32 %v1686, %v1722
        %v1755 = vadd.f32 %v1687, %v1723
        %v1756 = vadd.f32 %v1688, %v1724
        %v1757 = vadd.f32 %v1689, %v1725
        %v1758 = vadd.f32 %v1690, %v1726
        %v1759 = vrot.slane %v1204, 2
        %v1760 = vrot.slane %v1207, 2
        %v1761 = vrot.slane %v1210, 2
        %v1762 = vrot.slane %v1213, 2
        %v1763 = vrot.slane %v1216, 2
        %v1764 = vrot.slane %v1219, 2
        %v1765 = vrot.slane %v1222, 2
        %v1766 = vrot.slane %v1225, 2
        %v1767 = vrot.slane %v1228, 2
        %v1768 = vrot.slane %v1231, 2
        %v1769 = vrot.slane %v1234, 2
        %v1770 = vrot.slane %v1237, 2
        %v1771 = vrot.slane %v1240, 2
        %v1772 = vrot.slane %v1243, 2
        %v1773 = vrot.slane %v1246, 2
        %v1774 = vrot.slane %v1249, 2
        %v1775 = vrot.slane %v1252, 2
        %v1776 = vrot.slane %v1255, 2
        %v1777 = vrot.slane %v1205, 2
        %v1778 = vrot.slane %v1208, 2
        %v1779 = vrot.slane %v1211, 2
        %v1780 = vrot.slane %v1214, 2
        %v1781 = vrot.slane %v1217, 2
        %v1782 = vrot.slane %v1220, 2
        %v1783 = vrot.slane %v1223, 2
        %v1784 = vrot.slane %v1226, 2
        %v1785 = vrot.slane %v1229, 2
        %v1786 = vrot.slane %v1232, 2
        %v1787 = vrot.slane %v1235, 2
        %v1788 = vrot.slane %v1238, 2
        %v1789 = vrot.slane %v1241, 2
        %v1790 = vrot.slane %v1244, 2
        %v1791 = vrot.slane %v1247, 2
        %v1792 = vrot.slane %v1250, 2
        %v1793 = vrot.slane %v1253, 2
        %v1794 = vrot.slane %v1256, 2
        %v1795 = vrot.slane %v1206, 2
        %v1796 = vrot.slane %v1209, 2
        %v1797 = vrot.slane %v1212, 2
        %v1798 = vrot.slane %v1215, 2
        %v1799 = vrot.slane %v1218, 2
        %v1800 = vrot.slane %v1221, 2
        %v1801 = vrot.slane %v1224, 2
        %v1802 = vrot.slane %v1227, 2
        %v1803 = vrot.slane %v1230, 2
        %v1804 = vrot.slane %v1233, 2
        %v1805 = vrot.slane %v1236, 2
        %v1806 = vrot.slane %v1239, 2
        %v1807 = vrot.slane %v1242, 2
        %v1808 = vrot.slane %v1245, 2
        %v1809 = vrot.slane %v1248, 2
        %v1810 = vrot.slane %v1251, 2
        %v1811 = vrot.slane %v1254, 2
        %v1812 = vrot.slane %v1257, 2
        %vm1813 = vcmp.lt.s32.totalorder %v925, 6
        %v1814 = vsel %vm1813, %v1777, %v1795
        %v1815 = vsel %vm1813, %v1778, %v1796
        %v1816 = vsel %vm1813, %v1779, %v1797
        %v1817 = vsel %vm1813, %v1780, %v1798
        %v1818 = vsel %vm1813, %v1781, %v1799
        %v1819 = vsel %vm1813, %v1782, %v1800
        %v1820 = vsel %vm1813, %v1783, %v1801
        %v1821 = vsel %vm1813, %v1784, %v1802
        %v1822 = vsel %vm1813, %v1785, %v1803
        %v1823 = vsel %vm1813, %v1786, %v1804
        %v1824 = vsel %vm1813, %v1787, %v1805
        %v1825 = vsel %vm1813, %v1788, %v1806
        %v1826 = vsel %vm1813, %v1789, %v1807
        %v1827 = vsel %vm1813, %v1790, %v1808
        %v1828 = vsel %vm1813, %v1791, %v1809
        %v1829 = vsel %vm1813, %v1792, %v1810
        %v1830 = vsel %vm1813, %v1793, %v1811
        %v1831 = vsel %vm1813, %v1794, %v1812
        %v1832 = vsel %vm1813, %v1759, %v1777
        %v1833 = vsel %vm1813, %v1760, %v1778
        %v1834 = vsel %vm1813, %v1761, %v1779
        %v1835 = vsel %vm1813, %v1762, %v1780
        %v1836 = vsel %vm1813, %v1763, %v1781
        %v1837 = vsel %vm1813, %v1764, %v1782
        %v1838 = vsel %vm1813, %v1765, %v1783
        %v1839 = vsel %vm1813, %v1766, %v1784
        %v1840 = vsel %vm1813, %v1767, %v1785
        %v1841 = vsel %vm1813, %v1768, %v1786
        %v1842 = vsel %vm1813, %v1769, %v1787
        %v1843 = vsel %vm1813, %v1770, %v1788
        %v1844 = vsel %vm1813, %v1771, %v1789
        %v1845 = vsel %vm1813, %v1772, %v1790
        %v1846 = vsel %vm1813, %v1773, %v1791
        %v1847 = vsel %vm1813, %v1774, %v1792
        %v1848 = vsel %vm1813, %v1775, %v1793
        %v1849 = vsel %vm1813, %v1776, %v1794
        %v1850 = vlaneseq
        %v1851 = vshrl.u32 %v1850, 7
        %v1852 = vsub.s32 2, %v1851
        %v1853 = vrot.slane %v1258, %v1852
        %v1854 = vmul.f32 %v1832, %v1853
        %v1855 = vmul.f32 %v1814, %v1853
        %v1856 = vmul.f32 %v1833, %v1853
        %v1857 = vmul.f32 %v1815, %v1853
        %v1858 = vmul.f32 %v1834, %v1853
        %v1859 = vmul.f32 %v1816, %v1853
        %v1860 = vmul.f32 %v1835, %v1853
        %v1861 = vmul.f32 %v1817, %v1853
        %v1862 = vmul.f32 %v1836, %v1853
        %v1863 = vmul.f32 %v1818, %v1853
        %v1864 = vmul.f32 %v1837, %v1853
        %v1865 = vmul.f32 %v1819, %v1853
        %v1866 = vmul.f32 %v1838, %v1853
        %v1867 = vmul.f32 %v1820, %v1853
        %v1868 = vmul.f32 %v1839, %v1853
        %v1869 = vmul.f32 %v1821, %v1853
        %v1870 = vmul.f32 %v1840, %v1853
        %v1871 = vmul.f32 %v1822, %v1853
        %v1872 = vmul.f32 %v1841, %v1853
        %v1873 = vmul.f32 %v1823, %v1853
        %v1874 = vmul.f32 %v1842, %v1853
        %v1875 = vmul.f32 %v1824, %v1853
        %v1876 = vmul.f32 %v1843, %v1853
        %v1877 = vmul.f32 %v1825, %v1853
        %v1878 = vmul.f32 %v1844, %v1853
        %v1879 = vmul.f32 %v1826, %v1853
        %v1880 = vmul.f32 %v1845, %v1853
        %v1881 = vmul.f32 %v1827, %v1853
        %v1882 = vmul.f32 %v1846, %v1853
        %v1883 = vmul.f32 %v1828, %v1853
        %v1884 = vmul.f32 %v1847, %v1853
        %v1885 = vmul.f32 %v1829, %v1853
        %v1886 = vadd.f32 %v1727, %v1854
        %v1887 = vadd.f32 %v1728, %v1855
        %v1888 = vadd.f32 %v1729, %v1856
        %v1889 = vadd.f32 %v1730, %v1857
        %v1890 = vadd.f32 %v1731, %v1858
        %v1891 = vadd.f32 %v1732, %v1859
        %v1892 = vadd.f32 %v1733, %v1860
        %v1893 = vadd.f32 %v1734, %v1861
        %v1894 = vadd.f32 %v1735, %v1862
        %v1895 = vadd.f32 %v1736, %v1863
        %v1896 = vadd.f32 %v1737, %v1864
        %v1897 = vadd.f32 %v1738, %v1865
        %v1898 = vadd.f32 %v1739, %v1866
        %v1899 = vadd.f32 %v1740, %v1867
        %v1900 = vadd.f32 %v1741, %v1868
        %v1901 = vadd.f32 %v1742, %v1869
        %v1902 = vadd.f32 %v1743, %v1870
        %v1903 = vadd.f32 %v1744, %v1871
        %v1904 = vadd.f32 %v1745, %v1872
        %v1905 = vadd.f32 %v1746, %v1873
        %v1906 = vadd.f32 %v1747, %v1874
        %v1907 = vadd.f32 %v1748, %v1875
        %v1908 = vadd.f32 %v1749, %v1876
        %v1909 = vadd.f32 %v1750, %v1877
        %v1910 = vadd.f32 %v1751, %v1878
        %v1911 = vadd.f32 %v1752, %v1879
        %v1912 = vadd.f32 %v1753, %v1880
        %v1913 = vadd.f32 %v1754, %v1881
        %v1914 = vadd.f32 %v1755, %v1882
        %v1915 = vadd.f32 %v1756, %v1883
        %v1916 = vadd.f32 %v1757, %v1884
        %v1917 = vadd.f32 %v1758, %v1885
        %v1918 = vlaneseq
        %v1919 = vshrl.u32 %v1918, 7
        %v1920 = vsub.s32 5, %v1919
        %v1921 = vrot.slane %v1258, %v1920
        %v1922 = vmul.f32 %v1833, %v1921
        %v1923 = vmul.f32 %v1815, %v1921
        %v1924 = vmul.f32 %v1834, %v1921
        %v1925 = vmul.f32 %v1816, %v1921
        %v1926 = vmul.f32 %v1835, %v1921
        %v1927 = vmul.f32 %v1817, %v1921
        %v1928 = vmul.f32 %v1836, %v1921
        %v1929 = vmul.f32 %v1818, %v1921
        %v1930 = vmul.f32 %v1837, %v1921
        %v1931 = vmul.f32 %v1819, %v1921
        %v1932 = vmul.f32 %v1838, %v1921
        %v1933 = vmul.f32 %v1820, %v1921
        %v1934 = vmul.f32 %v1839, %v1921
        %v1935 = vmul.f32 %v1821, %v1921
        %v1936 = vmul.f32 %v1840, %v1921
        %v1937 = vmul.f32 %v1822, %v1921
        %v1938 = vmul.f32 %v1841, %v1921
        %v1939 = vmul.f32 %v1823, %v1921
        %v1940 = vmul.f32 %v1842, %v1921
        %v1941 = vmul.f32 %v1824, %v1921
        %v1942 = vmul.f32 %v1843, %v1921
        %v1943 = vmul.f32 %v1825, %v1921
        %v1944 = vmul.f32 %v1844, %v1921
        %v1945 = vmul.f32 %v1826, %v1921
        %v1946 = vmul.f32 %v1845, %v1921
        %v1947 = vmul.f32 %v1827, %v1921
        %v1948 = vmul.f32 %v1846, %v1921
        %v1949 = vmul.f32 %v1828, %v1921
        %v1950 = vmul.f32 %v1847, %v1921
        %v1951 = vmul.f32 %v1829, %v1921
        %v1952 = vmul.f32 %v1848, %v1921
        %v1953 = vmul.f32 %v1830, %v1921
        %v1954 = vadd.f32 %v1886, %v1922
        %v1955 = vadd.f32 %v1887, %v1923
        %v1956 = vadd.f32 %v1888, %v1924
        %v1957 = vadd.f32 %v1889, %v1925
        %v1958 = vadd.f32 %v1890, %v1926
        %v1959 = vadd.f32 %v1891, %v1927
        %v1960 = vadd.f32 %v1892, %v1928
        %v1961 = vadd.f32 %v1893, %v1929
        %v1962 = vadd.f32 %v1894, %v1930
        %v1963 = vadd.f32 %v1895, %v1931
        %v1964 = vadd.f32 %v1896, %v1932
        %v1965 = vadd.f32 %v1897, %v1933
        %v1966 = vadd.f32 %v1898, %v1934
        %v1967 = vadd.f32 %v1899, %v1935
        %v1968 = vadd.f32 %v1900, %v1936
        %v1969 = vadd.f32 %v1901, %v1937
        %v1970 = vadd.f32 %v1902, %v1938
        %v1971 = vadd.f32 %v1903, %v1939
        %v1972 = vadd.f32 %v1904, %v1940
        %v1973 = vadd.f32 %v1905, %v1941
        %v1974 = vadd.f32 %v1906, %v1942
        %v1975 = vadd.f32 %v1907, %v1943
        %v1976 = vadd.f32 %v1908, %v1944
        %v1977 = vadd.f32 %v1909, %v1945
        %v1978 = vadd.f32 %v1910, %v1946
        %v1979 = vadd.f32 %v1911, %v1947
        %v1980 = vadd.f32 %v1912, %v1948
        %v1981 = vadd.f32 %v1913, %v1949
        %v1982 = vadd.f32 %v1914, %v1950
        %v1983 = vadd.f32 %v1915, %v1951
        %v1984 = vadd.f32 %v1916, %v1952
        %v1985 = vadd.f32 %v1917, %v1953
        %v1986 = vlaneseq
        %v1987 = vshrl.u32 %v1986, 7
        %v1988 = vsub.s32 0, %v1987
        %v1989 = vrot.slane %v1259, %v1988
        %v1990 = vmul.f32 %v1834, %v1989
        %v1991 = vmul.f32 %v1816, %v1989
        %v1992 = vmul.f32 %v1835, %v1989
        %v1993 = vmul.f32 %v1817, %v1989
        %v1994 = vmul.f32 %v1836, %v1989
        %v1995 = vmul.f32 %v1818, %v1989
        %v1996 = vmul.f32 %v1837, %v1989
        %v1997 = vmul.f32 %v1819, %v1989
        %v1998 = vmul.f32 %v1838, %v1989
        %v1999 = vmul.f32 %v1820, %v1989
        %v2000 = vmul.f32 %v1839, %v1989
        %v2001 = vmul.f32 %v1821, %v1989
        %v2002 = vmul.f32 %v1840, %v1989
        %v2003 = vmul.f32 %v1822, %v1989
        %v2004 = vmul.f32 %v1841, %v1989
        %v2005 = vmul.f32 %v1823, %v1989
        %v2006 = vmul.f32 %v1842, %v1989
        %v2007 = vmul.f32 %v1824, %v1989
        %v2008 = vmul.f32 %v1843, %v1989
        %v2009 = vmul.f32 %v1825, %v1989
        %v2010 = vmul.f32 %v1844, %v1989
        %v2011 = vmul.f32 %v1826, %v1989
        %v2012 = vmul.f32 %v1845, %v1989
        %v2013 = vmul.f32 %v1827, %v1989
        %v2014 = vmul.f32 %v1846, %v1989
        %v2015 = vmul.f32 %v1828, %v1989
        %v2016 = vmul.f32 %v1847, %v1989
        %v2017 = vmul.f32 %v1829, %v1989
        %v2018 = vmul.f32 %v1848, %v1989
        %v2019 = vmul.f32 %v1830, %v1989
        %v2020 = vmul.f32 %v1849, %v1989
        %v2021 = vmul.f32 %v1831, %v1989
        %v2022 = vadd.f32 %v1954, %v1990
        %v2023 = vadd.f32 %v1955, %v1991
        %v2024 = vadd.f32 %v1956, %v1992
        %v2025 = vadd.f32 %v1957, %v1993
        %v2026 = vadd.f32 %v1958, %v1994
        %v2027 = vadd.f32 %v1959, %v1995
        %v2028 = vadd.f32 %v1960, %v1996
        %v2029 = vadd.f32 %v1961, %v1997
        %v2030 = vadd.f32 %v1962, %v1998
        %v2031 = vadd.f32 %v1963, %v1999
        %v2032 = vadd.f32 %v1964, %v2000
        %v2033 = vadd.f32 %v1965, %v2001
        %v2034 = vadd.f32 %v1966, %v2002
        %v2035 = vadd.f32 %v1967, %v2003
        %v2036 = vadd.f32 %v1968, %v2004
        %v2037 = vadd.f32 %v1969, %v2005
        %v2038 = vadd.f32 %v1970, %v2006
        %v2039 = vadd.f32 %v1971, %v2007
        %v2040 = vadd.f32 %v1972, %v2008
        %v2041 = vadd.f32 %v1973, %v2009
        %v2042 = vadd.f32 %v1974, %v2010
        %v2043 = vadd.f32 %v1975, %v2011
        %v2044 = vadd.f32 %v1976, %v2012
        %v2045 = vadd.f32 %v1977, %v2013
        %v2046 = vadd.f32 %v1978, %v2014
        %v2047 = vadd.f32 %v1979, %v2015
        %v2048 = vadd.f32 %v1980, %v2016
        %v2049 = vadd.f32 %v1981, %v2017
        %v2050 = vadd.f32 %v1982, %v2018
        %v2051 = vadd.f32 %v1983, %v2019
        %v2052 = vadd.f32 %v1984, %v2020
        %v2053 = vadd.f32 %v1985, %v2021
        %v2054 = vld [vmem:[#allocation10] sm:$0x1]
        %v2056 = vlaneseq
        %v2057 = vshrl.u32 %v2056, 7
        %v2058 = vsub.s32 0, %v2057
        %v2059 = vrot.slane %v2054, %v2058
        %v2061 = vadd.f32 %v2022, %v2059
        %v2062 = vadd.f32 %v2023, %v2059
        %v2063 = vadd.f32 %v2024, %v2059
        %v2064 = vadd.f32 %v2025, %v2059
        %v2065 = vadd.f32 %v2026, %v2059
        %v2066 = vadd.f32 %v2027, %v2059
        %v2067 = vadd.f32 %v2028, %v2059
        %v2068 = vadd.f32 %v2029, %v2059
        %v2069 = vadd.f32 %v2030, %v2059
        %v2070 = vadd.f32 %v2031, %v2059
        %v2071 = vadd.f32 %v2032, %v2059
        %v2072 = vadd.f32 %v2033, %v2059
        %v2073 = vadd.f32 %v2034, %v2059
        %v2074 = vadd.f32 %v2035, %v2059
        %v2075 = vadd.f32 %v2036, %v2059
        %v2076 = vadd.f32 %v2037, %v2059
        %v2077 = vadd.f32 %v2038, %v2059
        %v2078 = vadd.f32 %v2039, %v2059
        %v2079 = vadd.f32 %v2040, %v2059
        %v2080 = vadd.f32 %v2041, %v2059
        %v2081 = vadd.f32 %v2042, %v2059
        %v2082 = vadd.f32 %v2043, %v2059
        %v2083 = vadd.f32 %v2044, %v2059
        %v2084 = vadd.f32 %v2045, %v2059
        %v2085 = vadd.f32 %v2046, %v2059
        %v2086 = vadd.f32 %v2047, %v2059
        %v2087 = vadd.f32 %v2048, %v2059
        %v2088 = vadd.f32 %v2049, %v2059
        %v2089 = vadd.f32 %v2050, %v2059
        %v2090 = vadd.f32 %v2051, %v2059
        %v2091 = vadd.f32 %v2052, %v2059
        %v2092 = vadd.f32 %v2053, %v2059
        %v2093 = vmax.f32 %v2061, 0.0
        %v2094 = vmax.f32 %v2062, 0.0
        %v2095 = vmax.f32 %v2063, 0.0
        %v2096 = vmax.f32 %v2064, 0.0
        %v2097 = vmax.f32 %v2065, 0.0
        %v2098 = vmax.f32 %v2066, 0.0
        %v2099 = vmax.f32 %v2067, 0.0
        %v2100 = vmax.f32 %v2068, 0.0
        %v2101 = vmax.f32 %v2069, 0.0
        %v2102 = vmax.f32 %v2070, 0.0
        %v2103 = vmax.f32 %v2071, 0.0
        %v2104 = vmax.f32 %v2072, 0.0
        %v2105 = vmax.f32 %v2073, 0.0
        %v2106 = vmax.f32 %v2074, 0.0
        %v2107 = vmax.f32 %v2075, 0.0
        %v2108 = vmax.f32 %v2076, 0.0
        %v2109 = vmax.f32 %v2077, 0.0
        %v2110 = vmax.f32 %v2078, 0.0
        %v2111 = vmax.f32 %v2079, 0.0
        %v2112 = vmax.f32 %v2080, 0.0
        %v2113 = vmax.f32 %v2081, 0.0
        %v2114 = vmax.f32 %v2082, 0.0
        %v2115 = vmax.f32 %v2083, 0.0
        %v2116 = vmax.f32 %v2084, 0.0
        %v2117 = vmax.f32 %v2085, 0.0
        %v2118 = vmax.f32 %v2086, 0.0
        %v2119 = vmax.f32 %v2087, 0.0
        %v2120 = vmax.f32 %v2088, 0.0
        %v2121 = vmax.f32 %v2089, 0.0
        %v2122 = vmax.f32 %v2090, 0.0
        %v2123 = vmax.f32 %v2091, 0.0
        %v2124 = vmax.f32 %v2092, 0.0
        %v2125 = vmin.f32 %v2093, 6.0
        %v2126 = vmin.f32 %v2094, 6.0
        %v2127 = vmin.f32 %v2095, 6.0
        %v2128 = vmin.f32 %v2096, 6.0
        %v2129 = vmin.f32 %v2097, 6.0
        %v2130 = vmin.f32 %v2098, 6.0
        %v2131 = vmin.f32 %v2099, 6.0
        %v2132 = vmin.f32 %v2100, 6.0
        %v2133 = vmin.f32 %v2101, 6.0
        %v2134 = vmin.f32 %v2102, 6.0
        %v2135 = vmin.f32 %v2103, 6.0
        %v2136 = vmin.f32 %v2104, 6.0
        %v2137 = vmin.f32 %v2105, 6.0
        %v2138 = vmin.f32 %v2106, 6.0
        %v2139 = vmin.f32 %v2107, 6.0
        %v2140 = vmin.f32 %v2108, 6.0
        %v2141 = vmin.f32 %v2109, 6.0
        %v2142 = vmin.f32 %v2110, 6.0
        %v2143 = vmin.f32 %v2111, 6.0
        %v2144 = vmin.f32 %v2112, 6.0
        %v2145 = vmin.f32 %v2113, 6.0
        %v2146 = vmin.f32 %v2114, 6.0
        %v2147 = vmin.f32 %v2115, 6.0
        %v2148 = vmin.f32 %v2116, 6.0
        %v2149 = vmin.f32 %v2117, 6.0
        %v2150 = vmin.f32 %v2118, 6.0
        %v2151 = vmin.f32 %v2119, 6.0
        %v2152 = vmin.f32 %v2120, 6.0
        %v2153 = vmin.f32 %v2121, 6.0
        %v2154 = vmin.f32 %v2122, 6.0
        %v2155 = vmin.f32 %v2123, 6.0
        %v2156 = vmin.f32 %v2124, 6.0
        %v2157 = vpack.c.bf16 %v2126, %v2125
        %v2158 = vpack.c.bf16 %v2128, %v2127
        %v2159 = vpack.c.bf16 %v2130, %v2129
        %v2160 = vpack.c.bf16 %v2132, %v2131
        %v2161 = vpack.c.bf16 %v2134, %v2133
        %v2162 = vpack.c.bf16 %v2136, %v2135
        %v2163 = vpack.c.bf16 %v2138, %v2137
        %v2164 = vpack.c.bf16 %v2140, %v2139
        %v2165 = vpack.c.bf16 %v2142, %v2141
        %v2166 = vpack.c.bf16 %v2144, %v2143
        %v2167 = vpack.c.bf16 %v2146, %v2145
        %v2168 = vpack.c.bf16 %v2148, %v2147
        %v2169 = vpack.c.bf16 %v2150, %v2149
        %v2170 = vpack.c.bf16 %v2152, %v2151
        %v2171 = vpack.c.bf16 %v2154, %v2153
        %v2172 = vpack.c.bf16 %v2156, %v2155
        %v2173 = vld [vmem:[#allocation11] sm:$0xf]
        %v2174 = vld [vmem:[#allocation11 + $0x4] sm:$0xf]
        %v2175 = vld [vmem:[#allocation11 + $0x8] sm:$0xf]
        %v2176 = vld [vmem:[#allocation11 + $0xc] sm:$0xf]
        %v2177 = vld [vmem:[#allocation11 + $0x10] sm:$0xf]
        %v2178 = vld [vmem:[#allocation11 + $0x14] sm:$0xf]
        %v2179 = vld [vmem:[#allocation11 + $0x18] sm:$0xf]
        %v2180 = vld [vmem:[#allocation11 + $0x1c] sm:$0xf]
        %v2181 = vld [vmem:[#allocation11 + $0x20] sm:$0xf]
        %v2182 = vld [vmem:[#allocation11 + $0x24] sm:$0xf]
        %v2183 = vld [vmem:[#allocation11 + $0x28] sm:$0xf]
        %v2184 = vld [vmem:[#allocation11 + $0x2c] sm:$0xf]
        %v2185 = vld [vmem:[#allocation11 + $0x30] sm:$0xf]
        %v2186 = vld [vmem:[#allocation11 + $0x34] sm:$0xf]
        %v2187 = vld [vmem:[#allocation11 + $0x38] sm:$0xf]
        %v2188 = vld [vmem:[#allocation11 + $0x3c] sm:$0xf]
        %v2189 = vld [vmem:[#allocation13] sm:$0x1]
        %v2191 = vlaneseq
        %v2192 = vshrl.u32 %v2191, 7
        %v2193 = vsub.s32 0, %v2192
        %v2194 = vrot.slane %v2189, %v2193
        %v2212 = vunpack.c.l.b16 %v2173
        %v2213 = vunpack.c.l.b16 %v2174
        %v2214 = vunpack.c.l.b16 %v2175
        %v2215 = vunpack.c.l.b16 %v2176
        %v2216 = vunpack.c.l.b16 %v2177
        %v2217 = vunpack.c.l.b16 %v2178
        %v2218 = vunpack.c.l.b16 %v2179
        %v2219 = vunpack.c.l.b16 %v2180
        %v2220 = vunpack.c.l.b16 %v2181
        %v2221 = vunpack.c.l.b16 %v2182
        %v2222 = vunpack.c.l.b16 %v2183
        %v2223 = vunpack.c.l.b16 %v2184
        %v2224 = vunpack.c.l.b16 %v2185
        %v2225 = vunpack.c.l.b16 %v2186
        %v2226 = vunpack.c.l.b16 %v2187
        %v2227 = vunpack.c.l.b16 %v2188
        %v2228 = vpack.c.b16 %v2213, %v2212
        %v2229 = vpack.c.b16 %v2215, %v2214
        %v2230 = vpack.c.b16 %v2217, %v2216
        %v2231 = vpack.c.b16 %v2219, %v2218
        %v2232 = vpack.c.b16 %v2221, %v2220
        %v2233 = vpack.c.b16 %v2223, %v2222
        %v2234 = vpack.c.b16 %v2225, %v2224
        %v2235 = vpack.c.b16 %v2227, %v2226
        %2244 = vmatprep.subr.bf16.mxu0 0
        %2245 = vmatpush1.bf16.msra.mxu0 %v2228
        %2246 = vmatprep.subr.bf16.mxu0 0
        %2247 = vmatpush1.bf16.msra.mxu0 %v2229
        %2248 = vmatprep.subr.bf16.mxu0 0
        %2249 = vmatpush1.bf16.msra.mxu0 %v2230
        %2250 = vmatprep.subr.bf16.mxu0 0
        %2251 = vmatpush1.bf16.msra.mxu0 %v2231
        %2252 = vmatprep.subr.bf16.mxu0 0
        %2253 = vmatpush1.bf16.msra.mxu0 %v2232
        %2254 = vmatprep.subr.bf16.mxu0 0
        %2255 = vmatpush1.bf16.msra.mxu0 %v2233
        %2256 = vmatprep.subr.bf16.mxu0 0
        %2257 = vmatpush1.bf16.msra.mxu0 %v2234
        %2258 = vmatprep.subr.bf16.mxu0 0
        %2259 = vmatpush1.bf16.msra.mxu0 %v2235
        %2260 = vmatprep.subr.bf16.mxu0 0
        %2261 = vmatpush1.bf16.msra.mxu0 0
        %2262 = vmatprep.subr.bf16.mxu0 0
        %2263 = vmatpush1.bf16.msra.mxu0 0
        %2264 = vmatprep.subr.bf16.mxu0 0
        %2265 = vmatpush1.bf16.msra.mxu0 0
        %2266 = vmatprep.subr.bf16.mxu0 0
        %2267 = vmatpush1.bf16.msra.mxu0 0
        %2268 = vmatprep.subr.bf16.mxu0 0
        %2269 = vmatpush1.bf16.msra.mxu0 0
        %2270 = vmatprep.subr.bf16.mxu0 0
        %2271 = vmatpush1.bf16.msra.mxu0 0
        %2272 = vmatprep.subr.bf16.mxu0 0
        %2273 = vmatpush1.bf16.msra.mxu0 0
        %2274 = vmatprep.subr.bf16.mxu0 0
        %2275 = vmatpush1.bf16.msra.mxu0 0
        %2276 = vmatprep.mubr.bf16.mxu0 0
        %2277 = vmatmul.mubr.bf16.gmra.mrb[0].mxu0 %v2157
        %v2278 = vpop.f32.mrb[0].mxu0
        %v2279 = vadd.f32 %v2194, %v2278
        %v2280 = vpop.f32.mrb[0].mxu0
        %v2281 = vpop.f32.mrb[0].mxu0
        %v2282 = vadd.f32 %v2194, %v2281
        %v2283 = vpop.f32.mrb[0].mxu0
        %2284 = vmatprep.mubr.bf16.mxu0 0
        %2285 = vmatmul.mubr.bf16.gmra.mrb[0].mxu0 %v2158
        %v2286 = vpop.f32.mrb[0].mxu0
        %v2287 = vadd.f32 %v2194, %v2286
        %v2288 = vpop.f32.mrb[0].mxu0
        %v2289 = vpop.f32.mrb[0].mxu0
        %v2290 = vadd.f32 %v2194, %v2289
        %v2291 = vpop.f32.mrb[0].mxu0
        %2292 = vmatprep.mubr.bf16.mxu0 0
        %2293 = vmatmul.mubr.bf16.gmra.mrb[0].mxu0 %v2159
        %v2294 = vpop.f32.mrb[0].mxu0
        %v2295 = vadd.f32 %v2194, %v2294
        %v2296 = vpop.f32.mrb[0].mxu0
        %v2297 = vpop.f32.mrb[0].mxu0
        %v2298 = vadd.f32 %v2194, %v2297
        %v2299 = vpop.f32.mrb[0].mxu0
        %2300 = vmatprep.mubr.bf16.mxu0 0
        %2301 = vmatmul.mubr.bf16.gmra.mrb[0].mxu0 %v2160
        %v2302 = vpop.f32.mrb[0].mxu0
        %v2303 = vadd.f32 %v2194, %v2302
        %v2304 = vpop.f32.mrb[0].mxu0
        %v2305 = vpop.f32.mrb[0].mxu0
        %v2306 = vadd.f32 %v2194, %v2305
        %v2307 = vpop.f32.mrb[0].mxu0
        %2308 = vmatprep.mubr.bf16.mxu0 0
        %2309 = vmatmul.mubr.bf16.gmra.mrb[0].mxu0 %v2161
        %v2310 = vpop.f32.mrb[0].mxu0
        %v2311 = vadd.f32 %v2194, %v2310
        %v2312 = vpop.f32.mrb[0].mxu0
        %v2313 = vpop.f32.mrb[0].mxu0
        %v2314 = vadd.f32 %v2194, %v2313
        %v2315 = vpop.f32.mrb[0].mxu0
        %2316 = vmatprep.mubr.bf16.mxu0 0
        %2317 = vmatmul.mubr.bf16.gmra.mrb[0].mxu0 %v2162
        %v2318 = vpop.f32.mrb[0].mxu0
        %v2319 = vadd.f32 %v2194, %v2318
        %v2320 = vpop.f32.mrb[0].mxu0
        %v2321 = vpop.f32.mrb[0].mxu0
        %v2322 = vadd.f32 %v2194, %v2321
        %v2323 = vpop.f32.mrb[0].mxu0
        %2324 = vmatprep.mubr.bf16.mxu0 0
        %2325 = vmatmul.mubr.bf16.gmra.mrb[0].mxu0 %v2163
        %v2326 = vpop.f32.mrb[0].mxu0
        %v2327 = vadd.f32 %v2194, %v2326
        %v2328 = vpop.f32.mrb[0].mxu0
        %v2329 = vpop.f32.mrb[0].mxu0
        %v2330 = vadd.f32 %v2194, %v2329
        %v2331 = vpop.f32.mrb[0].mxu0
        %2332 = vmatprep.mubr.bf16.mxu0 0
        %2333 = vmatmul.mubr.bf16.gmra.mrb[0].mxu0 %v2164
        %v2334 = vpop.f32.mrb[0].mxu0
        %v2335 = vadd.f32 %v2194, %v2334
        %v2336 = vpop.f32.mrb[0].mxu0
        %v2337 = vpop.f32.mrb[0].mxu0
        %v2338 = vadd.f32 %v2194, %v2337
        %v2339 = vpop.f32.mrb[0].mxu0
        %2340 = vmatprep.mubr.bf16.mxu0 0
        %2341 = vmatmul.mubr.bf16.gmra.mrb[0].mxu0 %v2165
        %v2342 = vpop.f32.mrb[0].mxu0
        %v2343 = vadd.f32 %v2194, %v2342
        %v2344 = vpop.f32.mrb[0].mxu0
        %v2345 = vpop.f32.mrb[0].mxu0
        %v2346 = vadd.f32 %v2194, %v2345
        %v2347 = vpop.f32.mrb[0].mxu0
        %2348 = vmatprep.mubr.bf16.mxu0 0
        %2349 = vmatmul.mubr.bf16.gmra.mrb[0].mxu0 %v2166
        %v2350 = vpop.f32.mrb[0].mxu0
        %v2351 = vadd.f32 %v2194, %v2350
        %v2352 = vpop.f32.mrb[0].mxu0
        %v2353 = vpop.f32.mrb[0].mxu0
        %v2354 = vadd.f32 %v2194, %v2353
        %v2355 = vpop.f32.mrb[0].mxu0
        %2356 = vmatprep.mubr.bf16.mxu0 0
        %2357 = vmatmul.mubr.bf16.gmra.mrb[0].mxu0 %v2167
        %v2358 = vpop.f32.mrb[0].mxu0
        %v2359 = vadd.f32 %v2194, %v2358
        %v2360 = vpop.f32.mrb[0].mxu0
        %v2361 = vpop.f32.mrb[0].mxu0
        %v2362 = vadd.f32 %v2194, %v2361
        %v2363 = vpop.f32.mrb[0].mxu0
        %2364 = vmatprep.mubr.bf16.mxu0 0
        %2365 = vmatmul.mubr.bf16.gmra.mrb[0].mxu0 %v2168
        %v2366 = vpop.f32.mrb[0].mxu0
        %v2367 = vadd.f32 %v2194, %v2366
        %v2368 = vpop.f32.mrb[0].mxu0
        %v2369 = vpop.f32.mrb[0].mxu0
        %v2370 = vadd.f32 %v2194, %v2369
        %v2371 = vpop.f32.mrb[0].mxu0
        %2372 = vmatprep.mubr.bf16.mxu0 0
        %2373 = vmatmul.mubr.bf16.gmra.mrb[0].mxu0 %v2169
        %v2374 = vpop.f32.mrb[0].mxu0
        %v2375 = vadd.f32 %v2194, %v2374
        %v2376 = vpop.f32.mrb[0].mxu0
        %v2377 = vpop.f32.mrb[0].mxu0
        %v2378 = vadd.f32 %v2194, %v2377
        %v2379 = vpop.f32.mrb[0].mxu0
        %2380 = vmatprep.mubr.bf16.mxu0 0
        %2381 = vmatmul.mubr.bf16.gmra.mrb[0].mxu0 %v2170
        %v2382 = vpop.f32.mrb[0].mxu0
        %v2383 = vadd.f32 %v2194, %v2382
        %v2384 = vpop.f32.mrb[0].mxu0
        %v2385 = vpop.f32.mrb[0].mxu0
        %v2386 = vadd.f32 %v2194, %v2385
        %v2387 = vpop.f32.mrb[0].mxu0
        %2388 = vmatprep.mubr.bf16.mxu0 0
        %2389 = vmatmul.mubr.bf16.gmra.mrb[0].mxu0 %v2171
        %v2390 = vpop.f32.mrb[0].mxu0
        %v2391 = vadd.f32 %v2194, %v2390
        %v2392 = vpop.f32.mrb[0].mxu0
        %v2393 = vpop.f32.mrb[0].mxu0
        %v2394 = vadd.f32 %v2194, %v2393
        %v2395 = vpop.f32.mrb[0].mxu0
        %2396 = vmatprep.mubr.bf16.mxu0 0
        %2397 = vmatmul.mubr.bf16.gmra.mrb[0].mxu0 %v2172
        %v2398 = vpop.f32.mrb[0].mxu0
        %v2399 = vadd.f32 %v2194, %v2398
        %v2400 = vpop.f32.mrb[0].mxu0
        %v2401 = vpop.f32.mrb[0].mxu0
        %v2402 = vadd.f32 %v2194, %v2401
        %v2403 = vpop.f32.mrb[0].mxu0
        %2404 = vdwg.mxu0
        %v2405 = vrot.slane %v400, 1
        %v2406 = vrot.slane %v403, 1
        %v2407 = vrot.slane %v406, 1
        %v2408 = vrot.slane %v409, 1
        %v2409 = vrot.slane %v412, 1
        %v2410 = vrot.slane %v415, 1
        %v2411 = vrot.slane %v418, 1
        %v2412 = vrot.slane %v421, 1
        %v2413 = vrot.slane %v424, 1
        %v2414 = vrot.slane %v427, 1
        %v2415 = vrot.slane %v430, 1
        %v2416 = vrot.slane %v433, 1
        %v2417 = vrot.slane %v436, 1
        %v2418 = vrot.slane %v439, 1
        %v2419 = vrot.slane %v442, 1
        %v2420 = vrot.slane %v445, 1
        %v2421 = vrot.slane %v401, 1
        %v2422 = vrot.slane %v404, 1
        %v2423 = vrot.slane %v407, 1
        %v2424 = vrot.slane %v410, 1
        %v2425 = vrot.slane %v413, 1
        %v2426 = vrot.slane %v416, 1
        %v2427 = vrot.slane %v419, 1
        %v2428 = vrot.slane %v422, 1
        %v2429 = vrot.slane %v425, 1
        %v2430 = vrot.slane %v428, 1
        %v2431 = vrot.slane %v431, 1
        %v2432 = vrot.slane %v434, 1
        %v2433 = vrot.slane %v437, 1
        %v2434 = vrot.slane %v440, 1
        %v2435 = vrot.slane %v443, 1
        %v2436 = vrot.slane %v446, 1
        %v2437 = vrot.slane %v402, 1
        %v2438 = vrot.slane %v405, 1
        %v2439 = vrot.slane %v408, 1
        %v2440 = vrot.slane %v411, 1
        %v2441 = vrot.slane %v414, 1
        %v2442 = vrot.slane %v417, 1
        %v2443 = vrot.slane %v420, 1
        %v2444 = vrot.slane %v423, 1
        %v2445 = vrot.slane %v426, 1
        %v2446 = vrot.slane %v429, 1
        %v2447 = vrot.slane %v432, 1
        %v2448 = vrot.slane %v435, 1
        %v2449 = vrot.slane %v438, 1
        %v2450 = vrot.slane %v441, 1
        %v2451 = vrot.slane %v444, 1
        %v2452 = vrot.slane %v447, 1
        %v2453 = vsel %vm1518, %v2421, %v2437
        %v2454 = vsel %vm1518, %v2422, %v2438
        %v2455 = vsel %vm1518, %v2423, %v2439
        %v2456 = vsel %vm1518, %v2424, %v2440
        %v2457 = vsel %vm1518, %v2425, %v2441
        %v2458 = vsel %vm1518, %v2426, %v2442
        %v2459 = vsel %vm1518, %v2427, %v2443
        %v2460 = vsel %vm1518, %v2428, %v2444
        %v2461 = vsel %vm1518, %v2429, %v2445
        %v2462 = vsel %vm1518, %v2430, %v2446
        %v2463 = vsel %vm1518, %v2431, %v2447
        %v2464 = vsel %vm1518, %v2432, %v2448
        %v2465 = vsel %vm1518, %v2433, %v2449
        %v2466 = vsel %vm1518, %v2434, %v2450
        %v2467 = vsel %vm1518, %v2435, %v2451
        %v2468 = vsel %vm1518, %v2436, %v2452
        %v2469 = vsel %vm1518, %v2405, %v2421
        %v2470 = vsel %vm1518, %v2406, %v2422
        %v2471 = vsel %vm1518, %v2407, %v2423
        %v2472 = vsel %vm1518, %v2408, %v2424
        %v2473 = vsel %vm1518, %v2409, %v2425
        %v2474 = vsel %vm1518, %v2410, %v2426
        %v2475 = vsel %vm1518, %v2411, %v2427
        %v2476 = vsel %vm1518, %v2412, %v2428
        %v2477 = vsel %vm1518, %v2413, %v2429
        %v2478 = vsel %vm1518, %v2414, %v2430
        %v2479 = vsel %vm1518, %v2415, %v2431
        %v2480 = vsel %vm1518, %v2416, %v2432
        %v2481 = vsel %vm1518, %v2417, %v2433
        %v2482 = vsel %vm1518, %v2418, %v2434
        %v2483 = vsel %vm1518, %v2419, %v2435
        %v2484 = vsel %vm1518, %v2420, %v2436
        %v2485 = vadd.f32 %v2279, %v2469
        %v2486 = vadd.f32 %v2282, %v2453
        %v2487 = vadd.f32 %v2287, %v2470
        %v2488 = vadd.f32 %v2290, %v2454
        %v2489 = vadd.f32 %v2295, %v2471
        %v2490 = vadd.f32 %v2298, %v2455
        %v2491 = vadd.f32 %v2303, %v2472
        %v2492 = vadd.f32 %v2306, %v2456
        %v2493 = vadd.f32 %v2311, %v2473
        %v2494 = vadd.f32 %v2314, %v2457
        %v2495 = vadd.f32 %v2319, %v2474
        %v2496 = vadd.f32 %v2322, %v2458
        %v2497 = vadd.f32 %v2327, %v2475
        %v2498 = vadd.f32 %v2330, %v2459
        %v2499 = vadd.f32 %v2335, %v2476
        %v2500 = vadd.f32 %v2338, %v2460
        %v2501 = vadd.f32 %v2343, %v2477
        %v2502 = vadd.f32 %v2346, %v2461
        %v2503 = vadd.f32 %v2351, %v2478
        %v2504 = vadd.f32 %v2354, %v2462
        %v2505 = vadd.f32 %v2359, %v2479
        %v2506 = vadd.f32 %v2362, %v2463
        %v2507 = vadd.f32 %v2367, %v2480
        %v2508 = vadd.f32 %v2370, %v2464
        %v2509 = vadd.f32 %v2375, %v2481
        %v2510 = vadd.f32 %v2378, %v2465
        %v2511 = vadd.f32 %v2383, %v2482
        %v2512 = vadd.f32 %v2386, %v2466
        %v2513 = vadd.f32 %v2391, %v2483
        %v2514 = vadd.f32 %v2394, %v2467
        %v2515 = vadd.f32 %v2399, %v2484
        %v2516 = vadd.f32 %v2402, %v2468
        %2517 = vst [vmem:[%s391] sm:$0xff] %v2485
        %2518 = vst [vmem:[%s391 + $0x8] sm:$0xff] %v2486
        %2519 = vst [vmem:[%s391 + $0x10] sm:$0xff] %v2487
        %2520 = vst [vmem:[%s391 + $0x18] sm:$0xff] %v2488
        %2521 = vst [vmem:[%s391 + $0x20] sm:$0xff] %v2489
        %2522 = vst [vmem:[%s391 + $0x28] sm:$0xff] %v2490
        %2523 = vst [vmem:[%s391 + $0x30] sm:$0xff] %v2491
        %2524 = vst [vmem:[%s391 + $0x38] sm:$0xff] %v2492
        %2525 = vst [vmem:[%s391 + $0x40] sm:$0xff] %v2493
        %2526 = vst [vmem:[%s391 + $0x48] sm:$0xff] %v2494
        %2527 = vst [vmem:[%s391 + $0x50] sm:$0xff] %v2495
        %2528 = vst [vmem:[%s391 + $0x58] sm:$0xff] %v2496
        %2529 = vst [vmem:[%s391 + $0x60] sm:$0xff] %v2497
        %2530 = vst [vmem:[%s391 + $0x68] sm:$0xff] %v2498
        %2531 = vst [vmem:[%s391 + $0x70] sm:$0xff] %v2499
        %2532 = vst [vmem:[%s391 + $0x78] sm:$0xff] %v2500
        %2533 = vst [vmem:[%s391 + $0x80] sm:$0xff] %v2501
        %2534 = vst [vmem:[%s391 + $0x88] sm:$0xff] %v2502
        %2535 = vst [vmem:[%s391 + $0x90] sm:$0xff] %v2503
        %2536 = vst [vmem:[%s391 + $0x98] sm:$0xff] %v2504
        %2537 = vst [vmem:[%s391 + $0xa0] sm:$0xff] %v2505
        %2538 = vst [vmem:[%s391 + $0xa8] sm:$0xff] %v2506
        %2539 = vst [vmem:[%s391 + $0xb0] sm:$0xff] %v2507
        %2540 = vst [vmem:[%s391 + $0xb8] sm:$0xff] %v2508
        %2541 = vst [vmem:[%s391 + $0xc0] sm:$0xff] %v2509
        %2542 = vst [vmem:[%s391 + $0xc8] sm:$0xff] %v2510
        %2543 = vst [vmem:[%s391 + $0xd0] sm:$0xff] %v2511
        %2544 = vst [vmem:[%s391 + $0xd8] sm:$0xff] %v2512
        %2545 = vst [vmem:[%s391 + $0xe0] sm:$0xff] %v2513
        %2546 = vst [vmem:[%s391 + $0xe8] sm:$0xff] %v2514
        %2547 = vst [vmem:[%s391 + $0xf0] sm:$0xff] %v2515
        %2548 = vst [vmem:[%s391 + $0xf8] sm:$0xff] %v2516
        %s2549 = sand.u32 %s201, 1
        %s2550 = scalar_lea.sflag [#allocation4], %s2549
        %s2551 = sand.u32 %s201, 1
        %s2552 = smul.addr %s2551, 256
        %s2553 = scalar_lea.vmem [#allocation14], %s2552
        // Predicated region
        $region77: #{bottleneck_forward.1} parent=47 // pred_check
          %p2554 = pneg %p211
        $region78: #{bottleneck_forward.1} parent=47 // pred_check_branch
          %2556 = sbr.rel (%p2554) target = $region80
        $region79: #{bottleneck_forward.1} parent=47 // pred_region
          %s2557 = smul.u32 16, %s32
          %s2559 = ssub.s32 4096, 4096
          %2560 = vsyncadd %s2550, %s2559
          %s2561 = smul.addr %s2557, 2
          %s2562 = smul.addr %s31, 32
          %s2563 = sadd.s32 %s2561, %s2562
          %s2564 = smul.addr %s2563, 128
          %s2565 = scalar_lea.hbm %s7, %s2564
          %s2566 = sshll.u32 %s2553, 4
          %s2567 = int_to_ptr.vmem [resolvable:$true] %s2566
          %2572 = dma.vmem_to_hbm [thread:$0]  %s2567, 4096, %s2565, %s2550, 128, 128, 8
        $region80: #{bottleneck_forward.1} parent=47 // pred_fallthru
          _
      $region48: #{bottleneck_forward.1} parent=5 // pred_fallthru
        _
      %p2573 = scmp.le.s32.totalorder 2, %s22
      // Predicated region
      $region81: #{bottleneck_forward.1} parent=5 // pred_check
        %p2574 = pneg %p2573
      $region82: #{bottleneck_forward.1} parent=5 // pred_check_branch
        %2576 = sbr.rel (%p2574) target = $region84
      $region83: #{bottleneck_forward.1} parent=5 // pred_region
        %s2577 = ssub.s32 %s22, 2
        // Predicated region
        $region85: #{bottleneck_forward.1} parent=83 // pred_check
          %p2578 = pneg %p217
        $region86: #{bottleneck_forward.1} parent=83 // pred_check_branch
          %2580 = sbr.rel (%p2578) target = $region88
        $region87: #{bottleneck_forward.1} parent=83 // pred_region
          %s2581 = sand.u32 %s202, 1
          %s2582 = scalar_lea.sflag [#allocation4], %s2581
          %s2583 = sand.u32 %s202, 1
          %s2584 = smul.addr %s2583, 256
          %s2585 = scalar_lea.vmem [#allocation14], %s2584
          %2586 = dma.done %s2582, 4096
        $region88: #{bottleneck_forward.1} parent=83 // pred_fallthru
          _
      $region84: #{bottleneck_forward.1} parent=5 // pred_fallthru
        _
    $region6: #{bottleneck_forward.1} parent=1 // loop_footer
      %s26 = sadd.s32 1, %s22
    $region7: #{bottleneck_forward.1} parent=1 // loop_footer_branch
      %21 = sbr.rel target = $region3
    $region8: #{bottleneck_forward.1} parent=1 // loop_exit
      _
    %2587 = vsyncpa [#allocation3], 1
    %s2588 = scalar_lea.sflag [#allocation3], 1
    %2589 = vsyncpa %s2588, 1
    %2590 = vsyncpa [#allocation6], 1
    %2591 = vsyncpa [#allocation9], 1
    %2592 = vsyncpa [#allocation12], 1
    %2593 = vsyncpa [#allocation4], 1
    %s2594 = scalar_lea.sflag [#allocation4], 1
    %2595 = vsyncpa %s2594, 1

</llo_original>
